<compile_context>
chip_gen: v6e
topology: v6e:2x2x1
jax: 0.10.0
libtpu: 0.0.40
codegen_flags: <defaults>
</compile_context>

<pallas_src>
import functools

import jax
import jax.numpy as jnp
import numpy as np
from jax.experimental import pallas as pl
from jax.experimental.pallas import tpu as pltpu


def _round_up(a: int, b: int) -> int:
    return ((a + b - 1) // b) * b


# ----------------------------------------------------------------------------
# Pass 1: conv (K shifted MXU matmuls) + per-tile partial BN statistics
# ----------------------------------------------------------------------------
def _conv_stats_kernel(x_ref, w_ref, y_ref, ssum_ref, ssq_ref, *,
                       n_taps, tile_l, stride, dilation, cout_p, l_valid):
    # x_ref:  (1, L_x, Cin)      bf16   (whole padded sequence for this batch)
    # w_ref:  (K, Cin, Cout_p)   bf16
    # y_ref:  (1, 1, TILE_L, Cout_p)  f32
    # ssum_ref/ssq_ref: (1, 1, 1, Cout_p) f32
    t = pl.program_id(1)
    base = pl.multiple_of(t * (tile_l * stride), 128)

    acc = jnp.zeros((tile_l, cout_p), jnp.float32)
    if stride == 1:
        # Load the halo window once; slice taps on the (unpacked) f32 value and
        # feed the MXU in bf16 with f32 accumulation.
        win_len = tile_l + dilation * (n_taps - 1)
        win = x_ref[0, pl.ds(base, win_len), :].astype(jnp.float32)
        for j in range(n_taps):
            tap = win[j * dilation:j * dilation + tile_l, :]
            acc = acc + jnp.dot(tap.astype(jnp.bfloat16), w_ref[j],
                                preferred_element_type=jnp.float32)
    else:
        # TODO(synk): strided-window path (stride > 1) is functional but less tuned.
        for j in range(n_taps):
            tap = x_ref[0, pl.ds(base + j * dilation, tile_l, stride), :]
            acc = acc + jnp.dot(tap, w_ref[j],
                                preferred_element_type=jnp.float32)

    # Zero rows past the true output length so padded tile rows neither pollute
    # the batch statistics nor the intermediate y (they are sliced away later).
    row = jax.lax.broadcasted_iota(jnp.int32, (tile_l, 1), 0) + t * tile_l
    acc = jnp.where(row < l_valid, acc, 0.0)

    y_ref[0, 0] = acc
    ssum_ref[0, 0] = jnp.sum(acc, axis=0, keepdims=True)
    ssq_ref[0, 0] = jnp.sum(acc * acc, axis=0, keepdims=True)


# ----------------------------------------------------------------------------
# Pass 2: fused BN affine (scale/shift) + ReLU, transposed lane-dense store
# ----------------------------------------------------------------------------
def _bn_relu_kernel(y_ref, scale_ref, shift_ref, out_ref, *, cout):
    # y_ref: (1, 1, TILE_L, Cout_p) f32 ; scale/shift: (1, Cout_p) f32
    # out_ref: (1, Cout, TILE_L) f32  (L on lanes -> unmasked stores)
    z = y_ref[0, 0] * scale_ref[...] + shift_ref[...]
    z = jnp.maximum(z, 0.0)
    zt = z.T                                  # (Cout_p, TILE_L)
    out_ref[0] = zt[:cout, :].astype(out_ref.dtype)


# ----------------------------------------------------------------------------
# Wrapper: exact Conv1dSamePadding arithmetic + the two pallas_calls
# ----------------------------------------------------------------------------
def conv_block_forward(x, weight, bias, gamma, beta, *, stride=1, dilation=1,
                       eps=1e-5, tile_l=512, compute_dtype=jnp.bfloat16):
    """x: (N, Cin, L)  weight: (Cout, Cin, K)  -> (N, Cout, L_out) float32."""
    # The conv bias is cancelled exactly by the training-mode BN mean
    # subtraction, so it never needs to be applied.
    del bias

    n, cin, l_in = x.shape
    cout, _, k = weight.shape

    # ---- Conv1dSamePadding arithmetic (matches the PyTorch module) ----------
    pad_total = (l_in - 1) * stride - l_in + dilation * (k - 1) + 1
    x_nlc = jnp.transpose(x, (0, 2, 1))                    # (N, L, Cin)
    if pad_total % 2 != 0:
        x_nlc = jnp.pad(x_nlc, ((0, 0), (0, 1), (0, 0)))   # F.pad(input, [0, 1])
    half = pad_total // 2
    x_nlc = jnp.pad(x_nlc, ((0, 0), (half, half), (0, 0)))
    l_padded = x_nlc.shape[1]
    l_conv = (l_padded - dilation * (k - 1) - 1) // stride + 1   # true L_out

    # ---- Tiling --------------------------------------------------------------
    tl = _round_up(min(tile_l, _round_up(l_conv, 128)), 128)     # lane-aligned
    num_t = -(-l_conv // tl)
    l_out_pad = num_t * tl
    # Make sure the last tile's input window is in-bounds (extra zeros only).
    l_need = (l_out_pad - 1) * stride + dilation * (k - 1) + 1
    if l_need > l_padded:
        x_nlc = jnp.pad(x_nlc, ((0, 0), (0, l_need - l_padded), (0, 0)))
    x_nlc = x_nlc.astype(compute_dtype)
    x_len = x_nlc.shape[1]

    # ---- Weights: (Cout, Cin, K) -> (K, Cin, Cout_p), lane-dense -------------
    cout_p = _round_up(cout, 128)
    w_kco = jnp.transpose(weight, (2, 1, 0)).astype(compute_dtype)
    w_kco = jnp.pad(w_kco, ((0, 0), (0, 0), (0, cout_p - cout)))

    # ---- Pass 1: conv tiles + per-tile partial statistics --------------------
    conv_kernel = functools.partial(
        _conv_stats_kernel, n_taps=k, tile_l=tl, stride=stride,
        dilation=dilation, cout_p=cout_p, l_valid=l_conv)
    y, ssum, ssq = pl.pallas_call(
        conv_kernel,
        out_shape=(
            jax.ShapeDtypeStruct((n, num_t, tl, cout_p), jnp.float32),
            jax.ShapeDtypeStruct((n, num_t, 1, cout_p), jnp.float32),
            jax.ShapeDtypeStruct((n, num_t, 1, cout_p), jnp.float32),
        ),
        grid_spec=pltpu.PrefetchScalarGridSpec(
            num_scalar_prefetch=0,
            grid=(n, num_t),
            in_specs=[
                pl.BlockSpec((1, x_len, cin), lambda b, t: (b, 0, 0)),
                pl.BlockSpec((k, cin, cout_p), lambda b, t: (0, 0, 0)),
            ],
            out_specs=[
                pl.BlockSpec((1, 1, tl, cout_p), lambda b, t: (b, t, 0, 0)),
                pl.BlockSpec((1, 1, 1, cout_p), lambda b, t: (b, t, 0, 0)),
                pl.BlockSpec((1, 1, 1, cout_p), lambda b, t: (b, t, 0, 0)),
            ],
        ),
        compiler_params=pltpu.CompilerParams(
            dimension_semantics=("parallel", "parallel"),
            vmem_limit_bytes=48 * 1024 * 1024,
        ),
    )(x_nlc, w_kco)

    # ---- Tiny JAX reduction: fold batch stats + BN affine into scale/shift ---
    m_count = float(n * l_conv)                      # true #rows per channel
    total = jnp.sum(ssum, axis=(0, 1, 2))            # (Cout_p,)
    total_sq = jnp.sum(ssq, axis=(0, 1, 2))
    mean = total / m_count
    var = jnp.maximum(total_sq / m_count - mean * mean, 0.0)   # biased var
    inv_std = jax.lax.rsqrt(var + eps)
    gamma_p = jnp.pad(gamma.astype(jnp.float32), (0, cout_p - cout))
    beta_p = jnp.pad(beta.astype(jnp.float32), (0, cout_p - cout))
    scale = (gamma_p * inv_std).reshape(1, cout_p)
    shift = (beta_p - mean * gamma_p * inv_std).reshape(1, cout_p)

    # ---- Pass 2: normalize + ReLU, write (N, Cout, L) directly ---------------
    out_pad = pl.pallas_call(
        functools.partial(_bn_relu_kernel, cout=cout),
        out_shape=jax.ShapeDtypeStruct((n, cout, l_out_pad), jnp.float32),
        grid_spec=pltpu.PrefetchScalarGridSpec(
            num_scalar_prefetch=0,
            grid=(n, num_t),
            in_specs=[
                pl.BlockSpec((1, 1, tl, cout_p), lambda b, t: (b, t, 0, 0)),
                pl.BlockSpec((1, cout_p), lambda b, t: (0, 0)),
                pl.BlockSpec((1, cout_p), lambda b, t: (0, 0)),
            ],
            out_specs=pl.BlockSpec((1, cout, tl), lambda b, t: (b, 0, t)),
        ),
        compiler_params=pltpu.CompilerParams(
            dimension_semantics=("parallel", "parallel"),
            vmem_limit_bytes=48 * 1024 * 1024,
        ),
    )(y, scale, shift)

    return out_pad[:, :, :l_conv]


# ----------------------------------------------------------------------------
# Pure-JAX reference (same bf16 matmul operands, f32 accumulation) for checking
# ----------------------------------------------------------------------------
def _reference_forward(x, weight, bias, gamma, beta, *, stride=1, dilation=1,
                       eps=1e-5, compute_dtype=jnp.bfloat16):
    n, cin, l_in = x.shape
    cout, _, k = weight.shape
    pad_total = (l_in - 1) * stride - l_in + dilation * (k - 1) + 1
    if pad_total % 2 != 0:
        x = jnp.pad(x, ((0, 0), (0, 0), (0, 1)))
    y = jax.lax.conv_general_dilated(
        x.astype(compute_dtype), weight.astype(compute_dtype),
        window_strides=(stride,),
        padding=[(pad_total // 2, pad_total // 2)],
        rhs_dilation=(dilation,),
        dimension_numbers=("NCH", "OIH", "NCH"),
        preferred_element_type=jnp.float32)
    y = y + bias[None, :, None].astype(jnp.float32)
    mean = jnp.mean(y, axis=(0, 2), keepdims=True)
    var = jnp.mean((y - mean) ** 2, axis=(0, 2), keepdims=True)
    y = (y - mean) * jax.lax.rsqrt(var + eps) * gamma[None, :, None] \
        + beta[None, :, None]
    return jnp.maximum(y, 0.0)


# ----------------------------------------------------------------------------
if __name__ == "__main__":
    # ConvBlock(in_channels=4, out_channels=8, kernel_size=3, stride=1)
    batch, in_channels, length = 2, 4, 16
    out_channels, kernel_size, stride = 8, 3, 1

    key = jax.random.PRNGKey(0)
    kw, kb, kx, kg, kbe = jax.random.split(key, 5)

    weight = jax.random.normal(
        kw, (out_channels, in_channels, kernel_size), dtype=jnp.float32) * 0.1
    bias = jax.random.normal(kb, (out_channels,), dtype=jnp.float32) * 0.1
    gamma = 1.0 + 0.1 * jax.random.normal(kg, (out_channels,), dtype=jnp.float32)
    beta = 0.1 * jax.random.normal(kbe, (out_channels,), dtype=jnp.float32)
    x = jax.random.normal(kx, (batch, in_channels, length), dtype=jnp.float32)

    fwd = jax.jit(functools.partial(conv_block_forward, stride=stride))
    out = jax.block_until_ready(fwd(x, weight, bias, gamma, beta))

    ref = jax.block_until_ready(
        _reference_forward(x, weight, bias, gamma, beta, stride=stride))

    assert out.shape == (batch, out_channels, length), out.shape
    # Both paths use bf16 matmul operands with f32 accumulation; remaining
    # differences are accumulation-order / stats-formulation only.
    np.testing.assert_allclose(np.asarray(out), np.asarray(ref),
                               rtol=1e-3, atol=1e-3)
    print("KERNEL_OK")
</pallas_src>

<mosaic_0001>
module attributes {stable_mosaic.version = 11 : i64} {
  func.func @_bn_relu_kernel(%arg0: i32, %arg1: i32, %arg2: memref<1x1x128x128xf32, #tpu.memory_space<vmem>>, %arg3: memref<1x128xf32, #tpu.memory_space<vmem>>, %arg4: memref<1x128xf32, #tpu.memory_space<vmem>>, %arg5: memref<1x8x128xf32, #tpu.memory_space<vmem>>) attributes {dimension_semantics = [#tpu.dimension_semantics<parallel>, #tpu.dimension_semantics<parallel>], iteration_bounds = array<i64: 2, 1>, scalar_prefetch = 0 : i64, scratch_operands = 0 : i64, tpu.core_type = #tpu.core_type<tc>, window_params = [{transform_indices = @transform_0, window_bounds = array<i64: 1, 1, 128, 128>}, {pipeline_mode = #tpu.pipeline_mode<synchronous>, transform_indices = @transform_1, window_bounds = array<i64: 1, 128>}, {pipeline_mode = #tpu.pipeline_mode<synchronous>, transform_indices = @transform_2, window_bounds = array<i64: 1, 128>}, {transform_indices = @transform_3, window_bounds = array<i64: 1, 8, 128>}]} {
    %c0 = arith.constant 0 : index
    %c0_0 = arith.constant 0 : index
    %c0_1 = arith.constant 0 : index
    %c0_2 = arith.constant 0 : index
    %0 = vector.load %arg2[%c0, %c0_0, %c0_1, %c0_2] : memref<1x1x128x128xf32, #tpu.memory_space<vmem>>, vector<1x1x128x128xf32>
    %1 = vector.shape_cast %0 : vector<1x1x128x128xf32> to vector<128x128xf32>
    %c0_3 = arith.constant 0 : index
    %c0_4 = arith.constant 0 : index
    %2 = vector.load %arg3[%c0_3, %c0_4] : memref<1x128xf32, #tpu.memory_space<vmem>>, vector<1x128xf32>
    %3 = vector.broadcast %2 : vector<1x128xf32> to vector<128x128xf32>
    %4 = arith.mulf %1, %3 : vector<128x128xf32>
    %c0_5 = arith.constant 0 : index
    %c0_6 = arith.constant 0 : index
    %5 = vector.load %arg4[%c0_5, %c0_6] : memref<1x128xf32, #tpu.memory_space<vmem>>, vector<1x128xf32>
    %6 = vector.broadcast %5 : vector<1x128xf32> to vector<128x128xf32>
    %7 = arith.addf %4, %6 : vector<128x128xf32>
    %cst = arith.constant 0.000000e+00 : f32
    %8 = vector.broadcast %cst : f32 to vector<128x128xf32>
    %9 = arith.maximumf %7, %8 : vector<128x128xf32>
    %10 = tpu.transpose %9, [1, 0] : vector<128x128xf32> -> vector<128x128xf32>
    %11 = vector.extract_strided_slice %10 {offsets = [0, 0], sizes = [8, 128], strides = [1, 1]} : vector<128x128xf32> to vector<8x128xf32>
    %c0_7 = arith.constant 0 : index
    %c0_8 = arith.constant 0 : index
    %c0_9 = arith.constant 0 : index
    %12 = vector.load %arg5[%c0_7, %c0_8, %c0_9] : memref<1x8x128xf32, #tpu.memory_space<vmem>>, vector<1x8x128xf32>
    %13 = vector.shape_cast %12 : vector<1x8x128xf32> to vector<8x128xf32>
    %14 = vector.shape_cast %11 : vector<8x128xf32> to vector<1x8x128xf32>
    tpu.vector_store %arg5[%c0_7, %c0_8, %c0_9], %14 {strides = array<i32>} : memref<1x8x128xf32, #tpu.memory_space<vmem>>, vector<1x8x128xf32>,
    return
  }
  func.func @transform_0(%arg0: i32, %arg1: i32) -> (i32, i32, i32, i32) {
    %c0_i32 = arith.constant 0 : i32
    %c0_i32_0 = arith.constant 0 : i32
    %c0_i32_1 = arith.constant 0 : i32
    return %arg0, %arg1, %c0_i32, %c0_i32_0 : i32, i32, i32, i32
  }
  func.func @transform_1(%arg0: i32, %arg1: i32) -> (i32, i32) {
    %c0_i32 = arith.constant 0 : i32
    %c0_i32_0 = arith.constant 0 : i32
    %c0_i32_1 = arith.constant 0 : i32
    return %c0_i32, %c0_i32_0 : i32, i32
  }
  func.func @transform_2(%arg0: i32, %arg1: i32) -> (i32, i32) {
    %c0_i32 = arith.constant 0 : i32
    %c0_i32_0 = arith.constant 0 : i32
    %c0_i32_1 = arith.constant 0 : i32
    return %c0_i32, %c0_i32_0 : i32, i32
  }
  func.func @transform_3(%arg0: i32, %arg1: i32) -> (i32, i32, i32) {
    %c0_i32 = arith.constant 0 : i32
    %c0_i32_0 = arith.constant 0 : i32
    return %arg0, %c0_i32, %arg1 : i32, i32, i32
  }
}

module attributes {stable_mosaic.version = 11 : i64} {
  func.func @_conv_stats_kernel(%arg0: i32, %arg1: i32, %arg2: memref<1x130x4xbf16, #tpu.memory_space<vmem>>, %arg3: memref<3x4x128xbf16, #tpu.memory_space<vmem>>, %arg4: memref<1x1x128x128xf32, #tpu.memory_space<vmem>>, %arg5: memref<1x1x1x128xf32, #tpu.memory_space<vmem>>, %arg6: memref<1x1x1x128xf32, #tpu.memory_space<vmem>>) attributes {dimension_semantics = [#tpu.dimension_semantics<parallel>, #tpu.dimension_semantics<parallel>], iteration_bounds = array<i64: 2, 1>, scalar_prefetch = 0 : i64, scratch_operands = 0 : i64, tpu.core_type = #tpu.core_type<tc>, window_params = [{transform_indices = @transform_0, window_bounds = array<i64: 1, 130, 4>}, {pipeline_mode = #tpu.pipeline_mode<synchronous>, transform_indices = @transform_1, window_bounds = array<i64: 3, 4, 128>}, {transform_indices = @transform_2, window_bounds = array<i64: 1, 1, 128, 128>}, {transform_indices = @transform_3, window_bounds = array<i64: 1, 1, 1, 128>}, {transform_indices = @transform_4, window_bounds = array<i64: 1, 1, 1, 128>}]} {
    %c128_i32 = arith.constant 128 : i32
    %0 = arith.muli %arg1, %c128_i32 : i32
    %1 = tpu.assume_multiple %0, 128 : i32
    %cst = arith.constant 0.000000e+00 : f32
    %2 = vector.broadcast %cst : f32 to vector<128x128xf32>
    %c0 = arith.constant 0 : index
    %3 = arith.index_cast %1 : i32 to index
    %c0_0 = arith.constant 0 : index
    %4 = vector.load %arg2[%c0, %3, %c0_0] : memref<1x130x4xbf16, #tpu.memory_space<vmem>>, vector<1x130x4xbf16>
    %5 = vector.shape_cast %4 : vector<1x130x4xbf16> to vector<130x4xbf16>
    %6 = arith.extf %5 : vector<130x4xbf16> to vector<130x4xf32>
    %7 = vector.extract_strided_slice %6 {offsets = [0, 0], sizes = [128, 4], strides = [1, 1]} : vector<130x4xf32> to vector<128x4xf32>
    %8 = arith.truncf %7 : vector<128x4xf32> to vector<128x4xbf16>
    %c0_1 = arith.constant 0 : index
    %c0_2 = arith.constant 0 : index
    %c0_3 = arith.constant 0 : index
    %9 = vector.load %arg3[%c0_1, %c0_2, %c0_3] : memref<3x4x128xbf16, #tpu.memory_space<vmem>>, vector<1x4x128xbf16>
    %10 = vector.shape_cast %9 : vector<1x4x128xbf16> to vector<4x128xbf16>
    %cst_4 = arith.constant dense<0.000000e+00> : vector<128x128xf32>
    %11 = tpu.matmul %8, %10, %cst_4 {dimension_numbers = #tpu.dot_dimension_numbers<[1], [0], [0], [1], [0, 0, 1, 1], [], []>} : vector<128x4xbf16>, vector<4x128xbf16>, vector<128x128xf32> -> vector<128x128xf32>
    %12 = arith.addf %2, %11 : vector<128x128xf32>
    %13 = vector.extract_strided_slice %6 {offsets = [1, 0], sizes = [128, 4], strides = [1, 1]} : vector<130x4xf32> to vector<128x4xf32>
    %14 = arith.truncf %13 : vector<128x4xf32> to vector<128x4xbf16>
    %c1 = arith.constant 1 : index
    %c0_5 = arith.constant 0 : index
    %c0_6 = arith.constant 0 : index
    %15 = vector.load %arg3[%c1, %c0_5, %c0_6] : memref<3x4x128xbf16, #tpu.memory_space<vmem>>, vector<1x4x128xbf16>
    %16 = vector.shape_cast %15 : vector<1x4x128xbf16> to vector<4x128xbf16>
    %cst_7 = arith.constant dense<0.000000e+00> : vector<128x128xf32>
    %17 = tpu.matmul %14, %16, %cst_7 {dimension_numbers = #tpu.dot_dimension_numbers<[1], [0], [0], [1], [0, 0, 1, 1], [], []>} : vector<128x4xbf16>, vector<4x128xbf16>, vector<128x128xf32> -> vector<128x128xf32>
    %18 = arith.addf %12, %17 : vector<128x128xf32>
    %19 = vector.extract_strided_slice %6 {offsets = [2, 0], sizes = [128, 4], strides = [1, 1]} : vector<130x4xf32> to vector<128x4xf32>
    %20 = arith.truncf %19 : vector<128x4xf32> to vector<128x4xbf16>
    %c2 = arith.constant 2 : index
    %c0_8 = arith.constant 0 : index
    %c0_9 = arith.constant 0 : index
    %21 = vector.load %arg3[%c2, %c0_8, %c0_9] : memref<3x4x128xbf16, #tpu.memory_space<vmem>>, vector<1x4x128xbf16>
    %22 = vector.shape_cast %21 : vector<1x4x128xbf16> to vector<4x128xbf16>
    %cst_10 = arith.constant dense<0.000000e+00> : vector<128x128xf32>
    %23 = tpu.matmul %20, %22, %cst_10 {dimension_numbers = #tpu.dot_dimension_numbers<[1], [0], [0], [1], [0, 0, 1, 1], [], []>} : vector<128x4xbf16>, vector<4x128xbf16>, vector<128x128xf32> -> vector<128x128xf32>
    %24 = arith.addf %18, %23 : vector<128x128xf32>
    %25 = tpu.iota {dimensions = array<i32: 0>} : vector<128x1xi32>
    %c128_i32_11 = arith.constant 128 : i32
    %26 = arith.muli %arg1, %c128_i32_11 : i32
    %27 = vector.broadcast %26 : i32 to vector<128x1xi32>
    %28 = arith.addi %25, %27 : vector<128x1xi32>
    %c16_i32 = arith.constant 16 : i32
    %29 = vector.broadcast %c16_i32 : i32 to vector<128x1xi32>
    %30 = arith.cmpi slt, %28, %29 : vector<128x1xi32>
    %cst_12 = arith.constant 0.000000e+00 : f32
    %31 = vector.shape_cast %30 : vector<128x1xi1> to vector<128x1xi1>
    %32 = vector.broadcast %31 : vector<128x1xi1> to vector<128x128xi1>
    %33 = vector.broadcast %cst_12 : f32 to vector<128x128xf32>
    %34 = arith.select %32, %24, %33 : vector<128x128xi1>, vector<128x128xf32>
    %c0_13 = arith.constant 0 : index
    %c0_14 = arith.constant 0 : index
    %c0_15 = arith.constant 0 : index
    %c0_16 = arith.constant 0 : index
    %35 = vector.load %arg4[%c0_13, %c0_14, %c0_15, %c0_16] : memref<1x1x128x128xf32, #tpu.memory_space<vmem>>, vector<1x1x128x128xf32>
    %36 = vector.shape_cast %35 : vector<1x1x128x128xf32> to vector<128x128xf32>
    %37 = vector.shape_cast %34 : vector<128x128xf32> to vector<1x1x128x128xf32>
    tpu.vector_store %arg4[%c0_13, %c0_14, %c0_15, %c0_16], %37 {strides = array<i32>} : memref<1x1x128x128xf32, #tpu.memory_space<vmem>>, vector<1x1x128x128xf32>,
    %cst_17 = arith.constant dense<0.000000e+00> : vector<128xf32>
    %38 = vector.multi_reduction <add>, %34, %cst_17 [0] : vector<128x128xf32> to vector<128xf32>
    %39 = vector.shape_cast %38 : vector<128xf32> to vector<1x128xf32>
    %c0_18 = arith.constant 0 : index
    %c0_19 = arith.constant 0 : index
    %c0_20 = arith.constant 0 : index
    %c0_21 = arith.constant 0 : index
    %40 = vector.load %arg5[%c0_18, %c0_19, %c0_20, %c0_21] : memref<1x1x1x128xf32, #tpu.memory_space<vmem>>, vector<1x1x1x128xf32>
    %41 = vector.shape_cast %40 : vector<1x1x1x128xf32> to vector<1x128xf32>
    %42 = vector.shape_cast %39 : vector<1x128xf32> to vector<1x1x1x128xf32>
    tpu.vector_store %arg5[%c0_18, %c0_19, %c0_20, %c0_21], %42 {strides = array<i32>} : memref<1x1x1x128xf32, #tpu.memory_space<vmem>>, vector<1x1x1x128xf32>,
    %43 = arith.mulf %34, %34 : vector<128x128xf32>
    %cst_22 = arith.constant dense<0.000000e+00> : vector<128xf32>
    %44 = vector.multi_reduction <add>, %43, %cst_22 [0] : vector<128x128xf32> to vector<128xf32>
    %45 = vector.shape_cast %44 : vector<128xf32> to vector<1x128xf32>
    %c0_23 = arith.constant 0 : index
    %c0_24 = arith.constant 0 : index
    %c0_25 = arith.constant 0 : index
    %c0_26 = arith.constant 0 : index
    %46 = vector.load %arg6[%c0_23, %c0_24, %c0_25, %c0_26] : memref<1x1x1x128xf32, #tpu.memory_space<vmem>>, vector<1x1x1x128xf32>
    %47 = vector.shape_cast %46 : vector<1x1x1x128xf32> to vector<1x128xf32>
    %48 = vector.shape_cast %45 : vector<1x128xf32> to vector<1x1x1x128xf32>
    tpu.vector_store %arg6[%c0_23, %c0_24, %c0_25, %c0_26], %48 {strides = array<i32>} : memref<1x1x1x128xf32, #tpu.memory_space<vmem>>, vector<1x1x1x128xf32>,
    return
  }
  func.func @transform_0(%arg0: i32, %arg1: i32) -> (i32, i32, i32) {
    %c0_i32 = arith.constant 0 : i32
    %c0_i32_0 = arith.constant 0 : i32
    %c0_i32_1 = arith.constant 0 : i32
    return %arg0, %c0_i32, %c0_i32_0 : i32, i32, i32
  }
  func.func @transform_1(%arg0: i32, %arg1: i32) -> (i32, i32, i32) {
    %c0_i32 = arith.constant 0 : i32
    %c0_i32_0 = arith.constant 0 : i32
    %c0_i32_1 = arith.constant 0 : i32
    %c0_i32_2 = arith.constant 0 : i32
    return %c0_i32, %c0_i32_0, %c0_i32_1 : i32, i32, i32
  }
  func.func @transform_2(%arg0: i32, %arg1: i32) -> (i32, i32, i32, i32) {
    %c0_i32 = arith.constant 0 : i32
    %c0_i32_0 = arith.constant 0 : i32
    %c0_i32_1 = arith.constant 0 : i32
    return %arg0, %arg1, %c0_i32, %c0_i32_0 : i32, i32, i32, i32
  }
  func.func @transform_3(%arg0: i32, %arg1: i32) -> (i32, i32, i32, i32) {
    %c0_i32 = arith.constant 0 : i32
    %c0_i32_0 = arith.constant 0 : i32
    %c0_i32_1 = arith.constant 0 : i32
    return %arg0, %arg1, %c0_i32, %c0_i32_0 : i32, i32, i32, i32
  }
  func.func @transform_4(%arg0: i32, %arg1: i32) -> (i32, i32, i32, i32) {
    %c0_i32 = arith.constant 0 : i32
    %c0_i32_0 = arith.constant 0 : i32
    %c0_i32_1 = arith.constant 0 : i32
    return %arg0, %arg1, %c0_i32, %c0_i32_0 : i32, i32, i32, i32
  }
}

</mosaic_0001>

<llo_original>
// kernel: conv_block_forward.3
$region0: #{conv_block_forward.3}
  #allocation0 [shape = 'u32[]', space=smem, size = 0x4, offset = 0x4, fixed_abs, tag = 'smem constant byte address 0x4 - core index']
  #allocation1 [shape = 'u32[144,128]{1,0:T(1,128)}', space=vmem, size = 0x12000, scoped, tag = 'internal scratch']
  %s0 = inlined_call_operand.vmem [shape: f32[2,1,128,128], index: 0, kind: input, shape index: {}]
  %s1 = inlined_call_operand.vmem [shape: f32[1,128], index: 1, kind: input, shape index: {}]
  %s2 = inlined_call_operand.vmem [shape: f32[1,128], index: 2, kind: input, shape index: {}]
  %s3 = inlined_call_operand.hbm [shape: f32[2,8,128], index: 3, kind: output, shape index: {}]
  %s4 = sld [smem:[#allocation0]]
  $region45: #{conv_block_forward.3} parent=0
    _
  %s6 = ssub.s32 1, %s4
  %s7 = scalar_select 0, %s6, %s4
  $region1: #{conv_block_forward.3} parent=0
    #allocation2 [shape = 'u8[8192]{0}', space=vmem, size = 0x2000, scoped, tag = 'output window, operand 0']
    #allocation3 [shape = 's32[2]{0}', space=sflag, size = 0x8, scoped, tag = 'scoped memory for conv_block_forward.3']
    %8 = vsyncpa [#allocation3], 0
    %s9 = scalar_lea.sflag [#allocation3], 1
    %10 = vsyncpa %s9, 0
    loop: start=0, step=1, limit=4
    $region2: #{conv_block_forward.3} parent=1 // loop_pre_header
      _
    $region3: #{conv_block_forward.3} parent=1 // loop_header
      %s12 = sphi 0, %s16
      %p13 = scmp.ge.s32.totalorder %s12, 4
      %s19 = sphi 0, %s31
      %s20 = sphi 0, %s27
      %s21 = sphi 0, %s19
      %s22 = sphi 0, %s20
      %s23 = sphi 0, %s21
      %s24 = sphi 0, %s22
      %s36 = sphi 0, %s38
      %s39 = sphi 0, %s36
      %s40 = sphi 0, %s39
      %s56 = sphi 0, %s40
      %s60 = sphi 0, %s60
      %s62 = sphi 0, %s60
      %s63 = sphi 0, %s62
      %s77 = sphi 0, %s63
      %s81 = sphi 0, %s81
      %s83 = sphi 0, %s81
      %s84 = sphi 0, %s83
      %s98 = sphi 0, %s84
      %s106 = sphi 0, %s108
      %s109 = sphi 0, %s106
      %s110 = sphi 0, %s109
      %s126 = sphi 0, %s110
    $region4: #{conv_block_forward.3} parent=1 // loop_header_branch
      %15 = sbr.rel (%p13) target = $region8
    $region5: #{conv_block_forward.3} parent=1 // loop_body
      %s17 = ssub.s32 %s12, 1
      %s18 = ssub.s32 %s12, 2
      %s25 = sadd.s32 1, %s20
      %p26 = scmp.ge.s32.totalorder %s25, 1
      %s27 = scalar_select %p26, 0, %s25
      %s28 = sadd.s32 1, %s19
      %s29 = scalar_select %p26, %s28, %s19
      %p30 = scmp.ge.s32.totalorder %s29, 2
      %s31 = scalar_select %p30, 0, %s29
      %s32 = ssub.s32 %s19, %s31
      %s33 = ssub.s32 %s20, %s27
      %s34 = sor.u32 %s32, %s33
      %p35 = scmp.eq.s32.totalorder %s34, 0
      %s37 = sadd.s32 %s36, 1
      %s38 = scalar_select %p35, %s36, %s37
      %p41 = pneg %p35
      %p42 = scmp.eq.s32.totalorder %s12, 1
      %p43 = por %p41, %p42
      %p44 = scmp.ne.s32.totalorder %s36, %s39
      %p45 = scmp.eq.s32.totalorder %s12, 0
      %p46 = por %p44, %p45
      %p47 = scmp.ne.s32.totalorder %s36, %s39
      %p48 = scmp.eq.s32.totalorder %s17, 1
      %p49 = por %p47, %p48
      %p50 = scmp.ne.s32.totalorder %s39, %s40
      %p51 = scmp.eq.s32.totalorder %s17, 0
      %p52 = por %p50, %p51
      %p53 = scmp.ne.s32.totalorder %s39, %s40
      %p54 = scmp.eq.s32.totalorder %s18, 1
      %p55 = por %p53, %p54
      %p57 = scmp.ne.s32.totalorder %s40, %s56
      %p58 = scmp.eq.s32.totalorder %s18, 0
      %p59 = por %p57, %p58
      %s61 = sadd.s32 %s60, 1
      %p64 = scmp.eq.s32.totalorder %s12, 1
      %p65 = scmp.ne.s32.totalorder %s60, %s62
      %p66 = scmp.eq.s32.totalorder %s12, 0
      %p67 = por %p65, %p66
      %p68 = scmp.ne.s32.totalorder %s60, %s62
      %p69 = scmp.eq.s32.totalorder %s17, 1
      %p70 = por %p68, %p69
      %p71 = scmp.ne.s32.totalorder %s62, %s63
      %p72 = scmp.eq.s32.totalorder %s17, 0
      %p73 = por %p71, %p72
      %p74 = scmp.ne.s32.totalorder %s62, %s63
      %p75 = scmp.eq.s32.totalorder %s18, 1
      %p76 = por %p74, %p75
      %p78 = scmp.ne.s32.totalorder %s63, %s77
      %p79 = scmp.eq.s32.totalorder %s18, 0
      %p80 = por %p78, %p79
      %s82 = sadd.s32 %s81, 1
      %p85 = scmp.eq.s32.totalorder %s12, 1
      %p86 = scmp.ne.s32.totalorder %s81, %s83
      %p87 = scmp.eq.s32.totalorder %s12, 0
      %p88 = por %p86, %p87
      %p89 = scmp.ne.s32.totalorder %s81, %s83
      %p90 = scmp.eq.s32.totalorder %s17, 1
      %p91 = por %p89, %p90
      %p92 = scmp.ne.s32.totalorder %s83, %s84
      %p93 = scmp.eq.s32.totalorder %s17, 0
      %p94 = por %p92, %p93
      %p95 = scmp.ne.s32.totalorder %s83, %s84
      %p96 = scmp.eq.s32.totalorder %s18, 1
      %p97 = por %p95, %p96
      %p99 = scmp.ne.s32.totalorder %s84, %s98
      %p100 = scmp.eq.s32.totalorder %s18, 0
      %p101 = por %p99, %p100
      %s102 = ssub.s32 %s19, %s31
      %s103 = ssub.s32 %s20, %s27
      %s104 = sor.u32 %s102, %s103
      %p105 = scmp.eq.s32.totalorder %s104, 0
      %s107 = sadd.s32 %s106, 1
      %s108 = scalar_select %p105, %s106, %s107
      %p111 = pneg %p105
      %p112 = scmp.eq.s32.totalorder %s12, 1
      %p113 = por %p111, %p112
      %p114 = scmp.ne.s32.totalorder %s106, %s109
      %p115 = scmp.eq.s32.totalorder %s12, 0
      %p116 = por %p114, %p115
      %p117 = scmp.ne.s32.totalorder %s106, %s109
      %p118 = scmp.eq.s32.totalorder %s17, 1
      %p119 = por %p117, %p118
      %p120 = scmp.ne.s32.totalorder %s109, %s110
      %p121 = scmp.eq.s32.totalorder %s17, 0
      %p122 = por %p120, %p121
      %p123 = scmp.ne.s32.totalorder %s109, %s110
      %p124 = scmp.eq.s32.totalorder %s18, 1
      %p125 = por %p123, %p124
      %p127 = scmp.ne.s32.totalorder %s110, %s126
      %p128 = scmp.eq.s32.totalorder %s18, 0
      %p129 = por %p127, %p128
      %p130 = scmp.le.s32.totalorder 1, %s12
      %p131 = scmp.lt.s32.totalorder %s12, 3
      %p132 = pnand %p130, %p131
      %p133 = pneg %p132
      // Predicated region
      $region9: #{conv_block_forward.3} parent=5 // pred_check
        _
      $region10: #{conv_block_forward.3} parent=5 // pred_check_branch
        %135 = sbr.rel (%p132) target = $region12
      $region11: #{conv_block_forward.3} parent=5 // pred_region
        %s136 = ssub.s32 %s12, 1
        // Predicated region
        $region13: #{conv_block_forward.3} parent=11 // pred_check
          %p137 = pneg %p73
        $region14: #{conv_block_forward.3} parent=11 // pred_check_branch
          %139 = sbr.rel (%p137) target = $region16
        $region15: #{conv_block_forward.3} parent=11 // pred_region
          _
        $region16: #{conv_block_forward.3} parent=11 // pred_fallthru
          _
        // Predicated region
        $region17: #{conv_block_forward.3} parent=11 // pred_check
          %p140 = pneg %p94
        $region18: #{conv_block_forward.3} parent=11 // pred_check_branch
          %142 = sbr.rel (%p140) target = $region20
        $region19: #{conv_block_forward.3} parent=11 // pred_region
          _
        $region20: #{conv_block_forward.3} parent=11 // pred_fallthru
          _
      $region12: #{conv_block_forward.3} parent=5 // pred_fallthru
        _
      %p143 = scmp.lt.s32.totalorder %s12, 2
      // Predicated region
      $region21: #{conv_block_forward.3} parent=5 // pred_check
        %p144 = pneg %p143
      $region22: #{conv_block_forward.3} parent=5 // pred_check_branch
        %146 = sbr.rel (%p144) target = $region24
      $region23: #{conv_block_forward.3} parent=5 // pred_region
        // Predicated region
        $region25: #{conv_block_forward.3} parent=23 // pred_check
          %p147 = pneg %p46
        $region26: #{conv_block_forward.3} parent=23 // pred_check_branch
          %149 = sbr.rel (%p147) target = $region28
        $region27: #{conv_block_forward.3} parent=23 // pred_region
          %p150 = scmp.lt.s32.totalorder %s19, 1
          %s151 = scalar_select %p150, %s19, 1
          %p152 = scmp.lt.s32.totalorder %s20, 0
          %s153 = scalar_select %p152, %s20, 0
          %s154 = smul.addr %s153, 16
          %s155 = smul.addr %s151, 16
          %s156 = sadd.s32 %s154, %s155
          %s157 = smul.addr %s156, 8
          %s158 = scalar_lea.vmem %s0, %s157
        $region28: #{conv_block_forward.3} parent=23 // pred_fallthru
          _
      $region24: #{conv_block_forward.3} parent=5 // pred_fallthru
        _
      %p159 = scmp.le.s32.totalorder 1, %s12
      %p160 = scmp.lt.s32.totalorder %s12, 3
      %p161 = pnand %p159, %p160
      %p162 = pneg %p161
      // Predicated region
      $region29: #{conv_block_forward.3} parent=5 // pred_check
        _
      $region30: #{conv_block_forward.3} parent=5 // pred_check_branch
        %164 = sbr.rel (%p161) target = $region32
      $region31: #{conv_block_forward.3} parent=5 // pred_region
        %s165 = ssub.s32 %s12, 1
        %p166 = scmp.lt.s32.totalorder %s21, 1
        %s167 = scalar_select %p166, %s21, 1
        %p168 = scmp.lt.s32.totalorder %s22, 0
        %s169 = scalar_select %p168, %s22, 0
        %s170 = smul.addr %s169, 16
        %s171 = smul.addr %s167, 16
        %s172 = sadd.s32 %s170, %s171
        %s173 = smul.addr %s172, 8
        %s174 = scalar_lea.vmem %s0, %s173
        %p175 = pneg %p52
        %p176 = pneg %p49
        %p177 = pneg %p73
        %p178 = pneg %p70
        %p179 = pneg %p94
        %p180 = pneg %p91
        %p181 = pneg %p122
        %p182 = pneg %p119
        %s183 = sand.u32 %s109, 1
        %s184 = scalar_lea.sflag [#allocation3], %s183
        %s185 = sand.u32 %s109, 1
        %s186 = smul.addr %s185, 8
        %s187 = scalar_lea.vmem [#allocation2], %s186
        %p188 = scmp.lt.s32.totalorder %s21, 1
        %s189 = scalar_select %p188, %s21, 1
        %p190 = scmp.lt.s32.totalorder %s22, 0
        %s191 = scalar_select %p190, %s22, 0
        %s192 = smul.addr %s191, 16
        %s193 = smul.addr %s189, 16
        %s194 = sadd.s32 %s192, %s193
        %s195 = smul.addr %s194, 8
        %s196 = scalar_lea.vmem %s0, %s195
        %v197 = vld [vmem:[%s196] sm:$0xff]
        %v198 = vld [vmem:[%s196 + $0x8] sm:$0xff]
        %v199 = vld [vmem:[%s196 + $0x10] sm:$0xff]
        %v200 = vld [vmem:[%s196 + $0x18] sm:$0xff]
        %v201 = vld [vmem:[%s196 + $0x20] sm:$0xff]
        %v202 = vld [vmem:[%s196 + $0x28] sm:$0xff]
        %v203 = vld [vmem:[%s196 + $0x30] sm:$0xff]
        %v204 = vld [vmem:[%s196 + $0x38] sm:$0xff]
        %v205 = vld [vmem:[%s196 + $0x40] sm:$0xff]
        %v206 = vld [vmem:[%s196 + $0x48] sm:$0xff]
        %v207 = vld [vmem:[%s196 + $0x50] sm:$0xff]
        %v208 = vld [vmem:[%s196 + $0x58] sm:$0xff]
        %v209 = vld [vmem:[%s196 + $0x60] sm:$0xff]
        %v210 = vld [vmem:[%s196 + $0x68] sm:$0xff]
        %v211 = vld [vmem:[%s196 + $0x70] sm:$0xff]
        %v212 = vld [vmem:[%s196 + $0x78] sm:$0xff]
        %v213 = vld [vmem:[%s1] sm:$0x1]
        %v215 = vlaneseq
        %v216 = vshrl.u32 %v215, 7
        %v217 = vsub.s32 0, %v216
        %v218 = vrot.slane %v213, %v217
        %v220 = vmul.f32 %v197, %v218
        %v221 = vmul.f32 %v198, %v218
        %v222 = vmul.f32 %v199, %v218
        %v223 = vmul.f32 %v200, %v218
        %v224 = vmul.f32 %v201, %v218
        %v225 = vmul.f32 %v202, %v218
        %v226 = vmul.f32 %v203, %v218
        %v227 = vmul.f32 %v204, %v218
        %v228 = vmul.f32 %v205, %v218
        %v229 = vmul.f32 %v206, %v218
        %v230 = vmul.f32 %v207, %v218
        %v231 = vmul.f32 %v208, %v218
        %v232 = vmul.f32 %v209, %v218
        %v233 = vmul.f32 %v210, %v218
        %v234 = vmul.f32 %v211, %v218
        %v235 = vmul.f32 %v212, %v218
        %v236 = vld [vmem:[%s2] sm:$0x1]
        %v238 = vlaneseq
        %v239 = vshrl.u32 %v238, 7
        %v240 = vsub.s32 0, %v239
        %v241 = vrot.slane %v236, %v240
        %v243 = vadd.f32 %v220, %v241
        %v244 = vadd.f32 %v221, %v241
        %v245 = vadd.f32 %v222, %v241
        %v246 = vadd.f32 %v223, %v241
        %v247 = vadd.f32 %v224, %v241
        %v248 = vadd.f32 %v225, %v241
        %v249 = vadd.f32 %v226, %v241
        %v250 = vadd.f32 %v227, %v241
        %v251 = vadd.f32 %v228, %v241
        %v252 = vadd.f32 %v229, %v241
        %v253 = vadd.f32 %v230, %v241
        %v254 = vadd.f32 %v231, %v241
        %v255 = vadd.f32 %v232, %v241
        %v256 = vadd.f32 %v233, %v241
        %v257 = vadd.f32 %v234, %v241
        %v258 = vadd.f32 %v235, %v241
        %v259 = vmax.f32 %v243, 0.0
        %v260 = vmax.f32 %v244, 0.0
        %v261 = vmax.f32 %v245, 0.0
        %v262 = vmax.f32 %v246, 0.0
        %v263 = vmax.f32 %v247, 0.0
        %v264 = vmax.f32 %v248, 0.0
        %v265 = vmax.f32 %v249, 0.0
        %v266 = vmax.f32 %v250, 0.0
        %v267 = vmax.f32 %v251, 0.0
        %v268 = vmax.f32 %v252, 0.0
        %v269 = vmax.f32 %v253, 0.0
        %v270 = vmax.f32 %v254, 0.0
        %v271 = vmax.f32 %v255, 0.0
        %v272 = vmax.f32 %v256, 0.0
        %v273 = vmax.f32 %v257, 0.0
        %v274 = vmax.f32 %v258, 0.0
        %275 = vxpose.xlu0.b32.start [1/16] %v259, 128
        %276 = vxpose.xlu0.b32.cont [2/16] %v260, 128
        %277 = vxpose.xlu0.b32.cont [3/16] %v261, 128
        %278 = vxpose.xlu0.b32.cont [4/16] %v262, 128
        %279 = vxpose.xlu0.b32.cont [5/16] %v263, 128
        %280 = vxpose.xlu0.b32.cont [6/16] %v264, 128
        %281 = vxpose.xlu0.b32.cont [7/16] %v265, 128
        %282 = vxpose.xlu0.b32.cont [8/16] %v266, 128
        %283 = vxpose.xlu0.b32.cont [9/16] %v267, 128
        %284 = vxpose.xlu0.b32.cont [10/16] %v268, 128
        %285 = vxpose.xlu0.b32.cont [11/16] %v269, 128
        %286 = vxpose.xlu0.b32.cont [12/16] %v270, 128
        %287 = vxpose.xlu0.b32.cont [13/16] %v271, 128
        %288 = vxpose.xlu0.b32.cont [14/16] %v272, 128
        %289 = vxpose.xlu0.b32.cont [15/16] %v273, 128
        %290 = vxpose.xlu0.b32.end [16/16] %v274, 128
        %v291 = vpop.trf.xlu0
        %v292 = vpop.trf.xlu0
        %v293 = vpop.trf.xlu0
        %v294 = vpop.trf.xlu0
        %v295 = vpop.trf.xlu0
        %v296 = vpop.trf.xlu0
        %v297 = vpop.trf.xlu0
        %v298 = vpop.trf.xlu0
        %v299 = vpop.trf.xlu0
        %v300 = vpop.trf.xlu0
        %v301 = vpop.trf.xlu0
        %v302 = vpop.trf.xlu0
        %v303 = vpop.trf.xlu0
        %v304 = vpop.trf.xlu0
        %v305 = vpop.trf.xlu0
        %v306 = vpop.trf.xlu0
        %307 = vst [vmem:[%s187] sm:$0xff] %v291
        %s308 = sand.u32 %s109, 1
        %s309 = scalar_lea.sflag [#allocation3], %s308
        %s310 = sand.u32 %s109, 1
        %s311 = smul.addr %s310, 8
        %s312 = scalar_lea.vmem [#allocation2], %s311
        // Predicated region
        $region33: #{conv_block_forward.3} parent=31 // pred_check
          %p313 = pneg %p119
        $region34: #{conv_block_forward.3} parent=31 // pred_check_branch
          %315 = sbr.rel (%p313) target = $region36
        $region35: #{conv_block_forward.3} parent=31 // pred_region
          %s317 = ssub.s32 128, 128
          %318 = vsyncadd %s309, %s317
          %s319 = sadd.s32 %s22, %s21
          %s320 = smul.addr %s319, 128
          %s321 = scalar_lea.hbm %s3, %s320
          %s323 = sshll.u32 %s312, 4
          %s324 = int_to_ptr.vmem [resolvable:$true] %s323
          %326 = dma.vmem_to_hbm [thread:$0]  %s324, 128, %s321, %s309
        $region36: #{conv_block_forward.3} parent=31 // pred_fallthru
          _
      $region32: #{conv_block_forward.3} parent=5 // pred_fallthru
        _
      %p327 = scmp.le.s32.totalorder 2, %s12
      // Predicated region
      $region37: #{conv_block_forward.3} parent=5 // pred_check
        %p328 = pneg %p327
      $region38: #{conv_block_forward.3} parent=5 // pred_check_branch
        %330 = sbr.rel (%p328) target = $region40
      $region39: #{conv_block_forward.3} parent=5 // pred_region
        %s331 = ssub.s32 %s12, 2
        // Predicated region
        $region41: #{conv_block_forward.3} parent=39 // pred_check
          %p332 = pneg %p125
        $region42: #{conv_block_forward.3} parent=39 // pred_check_branch
          %334 = sbr.rel (%p332) target = $region44
        $region43: #{conv_block_forward.3} parent=39 // pred_region
          %s335 = sand.u32 %s110, 1
          %s336 = scalar_lea.sflag [#allocation3], %s335
          %s337 = sand.u32 %s110, 1
          %s338 = smul.addr %s337, 8
          %s339 = scalar_lea.vmem [#allocation2], %s338
          %340 = dma.done %s336, 128
        $region44: #{conv_block_forward.3} parent=39 // pred_fallthru
          _
      $region40: #{conv_block_forward.3} parent=5 // pred_fallthru
        _
    $region6: #{conv_block_forward.3} parent=1 // loop_footer
      %s16 = sadd.s32 1, %s12
    $region7: #{conv_block_forward.3} parent=1 // loop_footer_branch
      %11 = sbr.rel target = $region3
    $region8: #{conv_block_forward.3} parent=1 // loop_exit
      _
    %341 = vsyncpa [#allocation3], 1
    %s342 = scalar_lea.sflag [#allocation3], 1
    %343 = vsyncpa %s342, 1

// kernel: conv_block_forward.2
$region0: #{conv_block_forward.2}
  #allocation0 [shape = 'u32[]', space=smem, size = 0x4, offset = 0x4, fixed_abs, tag = 'smem constant byte address 0x4 - core index']
  #allocation1 [shape = 'u32[144,128]{1,0:T(1,128)}', space=vmem, size = 0x12000, scoped, tag = 'internal scratch']
  %s0 = inlined_call_operand.vmem [shape: bf16[2,130,4], index: 0, kind: input, shape index: {}]
  %s1 = inlined_call_operand.vmem [shape: bf16[3,4,128], index: 1, kind: input, shape index: {}]
  %s2 = inlined_call_operand.vmem [shape: f32[2,1,128,128], index: 2, kind: output, shape index: {0}]
  %s3 = inlined_call_operand.vmem [shape: f32[2,1,1,128], index: 3, kind: output, shape index: {1}]
  %s4 = inlined_call_operand.vmem [shape: f32[2,1,1,128], index: 4, kind: output, shape index: {2}]
  %5 = xla_tuple %s2, %s3, %s4
  %s6 = sld [smem:[#allocation0]]
  $region57: #{conv_block_forward.2} parent=0
    _
  %s8 = ssub.s32 1, %s6
  %s9 = scalar_select 0, %s8, %s6
  loop: start=0, step=1, limit=4
  $region2: #{conv_block_forward.2} parent=0 // loop_pre_header
    _
  $region3: #{conv_block_forward.2} parent=0 // loop_header
    %s11 = sphi 0, %s15
    %p12 = scmp.ge.s32.totalorder %s11, 4
    %s18 = sphi 0, %s30
    %s19 = sphi 0, %s26
    %s20 = sphi 0, %s18
    %s21 = sphi 0, %s19
    %s22 = sphi 0, %s20
    %s23 = sphi 0, %s21
    %s33 = sphi 0, %s35
    %s36 = sphi 0, %s33
    %s37 = sphi 0, %s36
    %s53 = sphi 0, %s37
    %s57 = sphi 0, %s57
    %s59 = sphi 0, %s57
    %s60 = sphi 0, %s59
    %s74 = sphi 0, %s60
    %s82 = sphi 0, %s84
    %s85 = sphi 0, %s82
    %s86 = sphi 0, %s85
    %s102 = sphi 0, %s86
    %s110 = sphi 0, %s112
    %s113 = sphi 0, %s110
    %s114 = sphi 0, %s113
    %s130 = sphi 0, %s114
    %s138 = sphi 0, %s140
    %s141 = sphi 0, %s138
    %s142 = sphi 0, %s141
    %s158 = sphi 0, %s142
  $region4: #{conv_block_forward.2} parent=0 // loop_header_branch
    %14 = sbr.rel (%p12) target = $region8
  $region5: #{conv_block_forward.2} parent=0 // loop_body
    %s16 = ssub.s32 %s11, 1
    %s17 = ssub.s32 %s11, 2
    %s24 = sadd.s32 1, %s19
    %p25 = scmp.ge.s32.totalorder %s24, 1
    %s26 = scalar_select %p25, 0, %s24
    %s27 = sadd.s32 1, %s18
    %s28 = scalar_select %p25, %s27, %s18
    %p29 = scmp.ge.s32.totalorder %s28, 2
    %s30 = scalar_select %p29, 0, %s28
    %s31 = ssub.s32 %s18, %s30
    %p32 = scmp.eq.s32.totalorder %s31, 0
    %s34 = sadd.s32 %s33, 1
    %s35 = scalar_select %p32, %s33, %s34
    %p38 = pneg %p32
    %p39 = scmp.eq.s32.totalorder %s11, 1
    %p40 = por %p38, %p39
    %p41 = scmp.ne.s32.totalorder %s33, %s36
    %p42 = scmp.eq.s32.totalorder %s11, 0
    %p43 = por %p41, %p42
    %p44 = scmp.ne.s32.totalorder %s33, %s36
    %p45 = scmp.eq.s32.totalorder %s16, 1
    %p46 = por %p44, %p45
    %p47 = scmp.ne.s32.totalorder %s36, %s37
    %p48 = scmp.eq.s32.totalorder %s16, 0
    %p49 = por %p47, %p48
    %p50 = scmp.ne.s32.totalorder %s36, %s37
    %p51 = scmp.eq.s32.totalorder %s17, 1
    %p52 = por %p50, %p51
    %p54 = scmp.ne.s32.totalorder %s37, %s53
    %p55 = scmp.eq.s32.totalorder %s17, 0
    %p56 = por %p54, %p55
    %s58 = sadd.s32 %s57, 1
    %p61 = scmp.eq.s32.totalorder %s11, 1
    %p62 = scmp.ne.s32.totalorder %s57, %s59
    %p63 = scmp.eq.s32.totalorder %s11, 0
    %p64 = por %p62, %p63
    %p65 = scmp.ne.s32.totalorder %s57, %s59
    %p66 = scmp.eq.s32.totalorder %s16, 1
    %p67 = por %p65, %p66
    %p68 = scmp.ne.s32.totalorder %s59, %s60
    %p69 = scmp.eq.s32.totalorder %s16, 0
    %p70 = por %p68, %p69
    %p71 = scmp.ne.s32.totalorder %s59, %s60
    %p72 = scmp.eq.s32.totalorder %s17, 1
    %p73 = por %p71, %p72
    %p75 = scmp.ne.s32.totalorder %s60, %s74
    %p76 = scmp.eq.s32.totalorder %s17, 0
    %p77 = por %p75, %p76
    %s78 = ssub.s32 %s18, %s30
    %s79 = ssub.s32 %s19, %s26
    %s80 = sor.u32 %s78, %s79
    %p81 = scmp.eq.s32.totalorder %s80, 0
    %s83 = sadd.s32 %s82, 1
    %s84 = scalar_select %p81, %s82, %s83
    %p87 = pneg %p81
    %p88 = scmp.eq.s32.totalorder %s11, 1
    %p89 = por %p87, %p88
    %p90 = scmp.ne.s32.totalorder %s82, %s85
    %p91 = scmp.eq.s32.totalorder %s11, 0
    %p92 = por %p90, %p91
    %p93 = scmp.ne.s32.totalorder %s82, %s85
    %p94 = scmp.eq.s32.totalorder %s16, 1
    %p95 = por %p93, %p94
    %p96 = scmp.ne.s32.totalorder %s85, %s86
    %p97 = scmp.eq.s32.totalorder %s16, 0
    %p98 = por %p96, %p97
    %p99 = scmp.ne.s32.totalorder %s85, %s86
    %p100 = scmp.eq.s32.totalorder %s17, 1
    %p101 = por %p99, %p100
    %p103 = scmp.ne.s32.totalorder %s86, %s102
    %p104 = scmp.eq.s32.totalorder %s17, 0
    %p105 = por %p103, %p104
    %s106 = ssub.s32 %s18, %s30
    %s107 = ssub.s32 %s19, %s26
    %s108 = sor.u32 %s106, %s107
    %p109 = scmp.eq.s32.totalorder %s108, 0
    %s111 = sadd.s32 %s110, 1
    %s112 = scalar_select %p109, %s110, %s111
    %p115 = pneg %p109
    %p116 = scmp.eq.s32.totalorder %s11, 1
    %p117 = por %p115, %p116
    %p118 = scmp.ne.s32.totalorder %s110, %s113
    %p119 = scmp.eq.s32.totalorder %s11, 0
    %p120 = por %p118, %p119
    %p121 = scmp.ne.s32.totalorder %s110, %s113
    %p122 = scmp.eq.s32.totalorder %s16, 1
    %p123 = por %p121, %p122
    %p124 = scmp.ne.s32.totalorder %s113, %s114
    %p125 = scmp.eq.s32.totalorder %s16, 0
    %p126 = por %p124, %p125
    %p127 = scmp.ne.s32.totalorder %s113, %s114
    %p128 = scmp.eq.s32.totalorder %s17, 1
    %p129 = por %p127, %p128
    %p131 = scmp.ne.s32.totalorder %s114, %s130
    %p132 = scmp.eq.s32.totalorder %s17, 0
    %p133 = por %p131, %p132
    %s134 = ssub.s32 %s18, %s30
    %s135 = ssub.s32 %s19, %s26
    %s136 = sor.u32 %s134, %s135
    %p137 = scmp.eq.s32.totalorder %s136, 0
    %s139 = sadd.s32 %s138, 1
    %s140 = scalar_select %p137, %s138, %s139
    %p143 = pneg %p137
    %p144 = scmp.eq.s32.totalorder %s11, 1
    %p145 = por %p143, %p144
    %p146 = scmp.ne.s32.totalorder %s138, %s141
    %p147 = scmp.eq.s32.totalorder %s11, 0
    %p148 = por %p146, %p147
    %p149 = scmp.ne.s32.totalorder %s138, %s141
    %p150 = scmp.eq.s32.totalorder %s16, 1
    %p151 = por %p149, %p150
    %p152 = scmp.ne.s32.totalorder %s141, %s142
    %p153 = scmp.eq.s32.totalorder %s16, 0
    %p154 = por %p152, %p153
    %p155 = scmp.ne.s32.totalorder %s141, %s142
    %p156 = scmp.eq.s32.totalorder %s17, 1
    %p157 = por %p155, %p156
    %p159 = scmp.ne.s32.totalorder %s142, %s158
    %p160 = scmp.eq.s32.totalorder %s17, 0
    %p161 = por %p159, %p160
    %p162 = scmp.le.s32.totalorder 1, %s11
    %p163 = scmp.lt.s32.totalorder %s11, 3
    %p164 = pnand %p162, %p163
    %p165 = pneg %p164
    // Predicated region
    $region9: #{conv_block_forward.2} parent=5 // pred_check
      _
    $region10: #{conv_block_forward.2} parent=5 // pred_check_branch
      %167 = sbr.rel (%p164) target = $region12
    $region11: #{conv_block_forward.2} parent=5 // pred_region
      %s168 = ssub.s32 %s11, 1
      // Predicated region
      $region13: #{conv_block_forward.2} parent=11 // pred_check
        %p169 = pneg %p70
      $region14: #{conv_block_forward.2} parent=11 // pred_check_branch
        %171 = sbr.rel (%p169) target = $region16
      $region15: #{conv_block_forward.2} parent=11 // pred_region
        _
      $region16: #{conv_block_forward.2} parent=11 // pred_fallthru
        _
    $region12: #{conv_block_forward.2} parent=5 // pred_fallthru
      _
    %p172 = scmp.lt.s32.totalorder %s11, 2
    // Predicated region
    $region17: #{conv_block_forward.2} parent=5 // pred_check
      %p173 = pneg %p172
    $region18: #{conv_block_forward.2} parent=5 // pred_check_branch
      %175 = sbr.rel (%p173) target = $region20
    $region19: #{conv_block_forward.2} parent=5 // pred_region
      // Predicated region
      $region21: #{conv_block_forward.2} parent=19 // pred_check
        %p176 = pneg %p43
      $region22: #{conv_block_forward.2} parent=19 // pred_check_branch
        %178 = sbr.rel (%p176) target = $region24
      $region23: #{conv_block_forward.2} parent=19 // pred_region
        %p179 = scmp.lt.s32.totalorder %s18, 1
        %s180 = scalar_select %p179, %s18, 1
        %s181 = smul.addr %s180, 17
        %s182 = smul.addr %s181, 4
        %s183 = scalar_lea.vmem %s0, %s182
      $region24: #{conv_block_forward.2} parent=19 // pred_fallthru
        _
    $region20: #{conv_block_forward.2} parent=5 // pred_fallthru
      _
    %p184 = scmp.le.s32.totalorder 1, %s11
    %p185 = scmp.lt.s32.totalorder %s11, 3
    %p186 = pnand %p184, %p185
    %p187 = pneg %p186
    // Predicated region
    $region25: #{conv_block_forward.2} parent=5 // pred_check
      _
    $region26: #{conv_block_forward.2} parent=5 // pred_check_branch
      %189 = sbr.rel (%p186) target = $region28
    $region27: #{conv_block_forward.2} parent=5 // pred_region
      %s190 = ssub.s32 %s11, 1
      %p191 = scmp.lt.s32.totalorder %s20, 1
      %s192 = scalar_select %p191, %s20, 1
      %s193 = smul.addr %s192, 17
      %s194 = smul.addr %s193, 4
      %s195 = scalar_lea.vmem %s0, %s194
      %p196 = pneg %p49
      %p197 = pneg %p46
      %p198 = pneg %p70
      %p199 = pneg %p67
      %p200 = pneg %p98
      %p201 = pneg %p95
      %p202 = scmp.lt.s32.totalorder %s20, 1
      %s203 = scalar_select %p202, %s20, 1
      %p204 = scmp.lt.s32.totalorder %s21, 0
      %s205 = scalar_select %p204, %s21, 0
      %s206 = smul.addr %s205, 16
      %s207 = smul.addr %s203, 16
      %s208 = sadd.s32 %s206, %s207
      %s209 = smul.addr %s208, 8
      %s210 = scalar_lea.vmem %s2, %s209
      %p211 = pneg %p126
      %p212 = pneg %p123
      %p213 = scmp.lt.s32.totalorder %s20, 1
      %s214 = scalar_select %p213, %s20, 1
      %p215 = scmp.lt.s32.totalorder %s21, 0
      %s216 = scalar_select %p215, %s21, 0
      %s217 = sadd.s32 %s216, %s214
      %s218 = scalar_lea.vmem %s3, %s217
      %p219 = pneg %p154
      %p220 = pneg %p151
      %p221 = scmp.lt.s32.totalorder %s20, 1
      %s222 = scalar_select %p221, %s20, 1
      %p223 = scmp.lt.s32.totalorder %s21, 0
      %s224 = scalar_select %p223, %s21, 0
      %s225 = sadd.s32 %s224, %s222
      %s226 = scalar_lea.vmem %s4, %s225
      %p227 = scmp.lt.s32.totalorder %s20, 1
      %s228 = scalar_select %p227, %s20, 1
      %s229 = smul.addr %s228, 17
      %s230 = smul.addr %s229, 4
      %s231 = scalar_lea.vmem %s0, %s230
      %p232 = scmp.lt.s32.totalorder %s20, 1
      %s233 = scalar_select %p232, %s20, 1
      %p234 = scmp.lt.s32.totalorder %s21, 0
      %s235 = scalar_select %p234, %s21, 0
      %s236 = smul.addr %s235, 16
      %s237 = smul.addr %s233, 16
      %s238 = sadd.s32 %s236, %s237
      %s239 = smul.addr %s238, 8
      %s240 = scalar_lea.vmem %s2, %s239
      %p241 = scmp.lt.s32.totalorder %s20, 1
      %s242 = scalar_select %p241, %s20, 1
      %p243 = scmp.lt.s32.totalorder %s21, 0
      %s244 = scalar_select %p243, %s21, 0
      %s245 = sadd.s32 %s244, %s242
      %s246 = scalar_lea.vmem %s3, %s245
      %p247 = scmp.lt.s32.totalorder %s20, 1
      %s248 = scalar_select %p247, %s20, 1
      %p249 = scmp.lt.s32.totalorder %s21, 0
      %s250 = scalar_select %p249, %s21, 0
      %s251 = sadd.s32 %s250, %s248
      %s252 = scalar_lea.vmem %s4, %s251
      %s254 = smul.u32 %s21, 128
      %s255 = sshra.s32 %s254, 3
      %s256 = sand.u32 %s254, 7
      %s257 = smul.addr %s255, 4
      %s258 = scalar_lea.vmem %s231, %s257
      %v259 = vld [vmem:[%s258] sm:$0xf]
      %v260 = vld [vmem:[%s258 + $0x4] sm:$0xf]
      %v261 = vld [vmem:[%s258 + $0x8] sm:$0xf]
      %v262 = vld [vmem:[%s258 + $0xc] sm:$0xf]
      %v263 = vld [vmem:[%s258 + $0x10] sm:$0xf]
      %v264 = vld [vmem:[%s258 + $0x14] sm:$0xf]
      %v265 = vld [vmem:[%s258 + $0x18] sm:$0xf]
      %v266 = vld [vmem:[%s258 + $0x1c] sm:$0xf]
      %v267 = vld [vmem:[%s258 + $0x20] sm:$0xf]
      %v268 = vld [vmem:[%s258 + $0x24] sm:$0xf]
      %v269 = vld [vmem:[%s258 + $0x28] sm:$0xf]
      %v270 = vld [vmem:[%s258 + $0x2c] sm:$0xf]
      %v271 = vld [vmem:[%s258 + $0x30] sm:$0xf]
      %v272 = vld [vmem:[%s258 + $0x34] sm:$0xf]
      %v273 = vld [vmem:[%s258 + $0x38] sm:$0xf]
      %v274 = vld [vmem:[%s258 + $0x3c] sm:$0xf]
      %v275 = vld [vmem:[%s258 + $0x40] sm:$0x1]
      %v276 = vunpack.c.l.bf16 %v259
      %v277 = vunpack.c.l.bf16 %v260
      %v278 = vunpack.c.l.bf16 %v261
      %v279 = vunpack.c.l.bf16 %v262
      %v280 = vunpack.c.l.bf16 %v263
      %v281 = vunpack.c.l.bf16 %v264
      %v282 = vunpack.c.l.bf16 %v265
      %v283 = vunpack.c.l.bf16 %v266
      %v284 = vunpack.c.l.bf16 %v267
      %v285 = vunpack.c.l.bf16 %v268
      %v286 = vunpack.c.l.bf16 %v269
      %v287 = vunpack.c.l.bf16 %v270
      %v288 = vunpack.c.l.bf16 %v271
      %v289 = vunpack.c.l.bf16 %v272
      %v290 = vunpack.c.l.bf16 %v273
      %v291 = vunpack.c.l.bf16 %v274
      %v292 = vunpack.c.l.bf16 %v275
      %v293 = vpack.c.bf16 %v277, %v276
      %v294 = vpack.c.bf16 %v279, %v278
      %v295 = vpack.c.bf16 %v281, %v280
      %v296 = vpack.c.bf16 %v283, %v282
      %v297 = vpack.c.bf16 %v285, %v284
      %v298 = vpack.c.bf16 %v287, %v286
      %v299 = vpack.c.bf16 %v289, %v288
      %v300 = vpack.c.bf16 %v291, %v290
      %v301 = vld [vmem:[%s1] sm:$0x3]
      %v302 = vpack.c.bf16 %v292, %v292
      %s303 = scalar_lea.vmem %s1, 2
      %v304 = vld [vmem:[%s303] sm:$0x3]
      %vm305 = vsmask.f32 7424
      %v307 = vshrl.u32 %v293, 16
      %v309 = vshll.u32 %v293, 16
      %v311 = vrot.slane %v309, 1
      %v312 = vor.u32 %v307, %v311
      %v314 = vshll.u32 %v294, 16
      %v316 = vrot.slane %v314, 1
      %v317 = vsel %vm305, %v312, %v316
      %v318 = vshrl.u32 %v294, 16
      %v320 = vor.u32 %v318, %v316
      %v322 = vshll.u32 %v295, 16
      %v324 = vrot.slane %v322, 1
      %v325 = vsel %vm305, %v320, %v324
      %v326 = vshrl.u32 %v295, 16
      %v328 = vor.u32 %v326, %v324
      %v330 = vshll.u32 %v296, 16
      %v332 = vrot.slane %v330, 1
      %v333 = vsel %vm305, %v328, %v332
      %v334 = vshrl.u32 %v296, 16
      %v336 = vor.u32 %v334, %v332
      %v338 = vshll.u32 %v297, 16
      %v340 = vrot.slane %v338, 1
      %v341 = vsel %vm305, %v336, %v340
      %v342 = vshrl.u32 %v297, 16
      %v344 = vor.u32 %v342, %v340
      %v346 = vshll.u32 %v298, 16
      %v348 = vrot.slane %v346, 1
      %v349 = vsel %vm305, %v344, %v348
      %v350 = vshrl.u32 %v298, 16
      %v352 = vor.u32 %v350, %v348
      %v354 = vshll.u32 %v299, 16
      %v356 = vrot.slane %v354, 1
      %v357 = vsel %vm305, %v352, %v356
      %v358 = vshrl.u32 %v299, 16
      %v360 = vor.u32 %v358, %v356
      %v362 = vshll.u32 %v300, 16
      %v364 = vrot.slane %v362, 1
      %v365 = vsel %vm305, %v360, %v364
      %v366 = vshrl.u32 %v300, 16
      %v368 = vor.u32 %v366, %v364
      %v370 = vshll.u32 %v302, 16
      %v372 = vrot.slane %v370, 1
      %v373 = vsel %vm305, %v368, %v372
      %vm374 = vcmask 31744
      %v376 = vsel %vm374, %v317, 0
      %v379 = vsel %vm374, %v325, 0
      %v382 = vsel %vm374, %v333, 0
      %v385 = vsel %vm374, %v341, 0
      %v388 = vsel %vm374, %v349, 0
      %v391 = vsel %vm374, %v357, 0
      %v394 = vsel %vm374, %v365, 0
      %v397 = vsel %vm374, %v373, 0
      %vm399 = vcmask 1041408
      %v401 = vsel %vm399, %v304, 0
      %403 = vmatprep.subr.bf16.mxu0 0
      %404 = vmatpush1.bf16.msra.mxu0 0
      %405 = vmatprep.subr.bf16.mxu0 0
      %406 = vmatpush1.bf16.msra.mxu0 0
      %407 = vmatprep.subr.bf16.mxu0 0
      %408 = vmatpush1.bf16.msra.mxu0 0
      %409 = vmatprep.subr.bf16.mxu0 0
      %410 = vmatpush1.bf16.msra.mxu0 0
      %411 = vmatprep.subr.bf16.mxu0 0
      %412 = vmatpush1.bf16.msra.mxu0 0
      %413 = vmatprep.subr.bf16.mxu0 0
      %414 = vmatpush1.bf16.msra.mxu0 0
      %415 = vmatprep.subr.bf16.mxu0 0
      %416 = vmatpush1.bf16.msra.mxu0 0
      %417 = vmatprep.subr.bf16.mxu0 0
      %418 = vmatpush1.bf16.msra.mxu0 %v401
      %419 = vmatprep.subr.bf16.mxu0 0
      %420 = vmatpush2.bf16.msra.mxu0 0
      %421 = vmatprep.subr.bf16.mxu0 0
      %422 = vmatpush2.bf16.msra.mxu0 0
      %423 = vmatprep.subr.bf16.mxu0 0
      %424 = vmatpush2.bf16.msra.mxu0 0
      %425 = vmatprep.subr.bf16.mxu0 0
      %426 = vmatpush2.bf16.msra.mxu0 0
      %427 = vmatprep.subr.bf16.mxu0 0
      %428 = vmatpush2.bf16.msra.mxu0 0
      %429 = vmatprep.subr.bf16.mxu0 0
      %430 = vmatpush2.bf16.msra.mxu0 0
      %431 = vmatprep.subr.bf16.mxu0 0
      %432 = vmatpush2.bf16.msra.mxu0 0
      %433 = vmatprep.subr.bf16.mxu0 0
      %434 = vmatpush2.bf16.msra.mxu0 0
      %435 = vmatprep.mubr.bf16.mxu0 0
      %436 = vmatmul.mubr.bf16.gmra.mxu0 %v376
      %v437 = vpop.f32.mrf.mxu0
      %v438 = vadd.f32 0.0, %v437
      %v439 = vpop.f32.mrf.mxu0
      %v440 = vpop.f32.mrf.mxu0
      %v441 = vadd.f32 0.0, %v440
      %v442 = vpop.f32.mrf.mxu0
      %443 = vmatprep.mubr.bf16.mxu0 0
      %444 = vmatmul.mubr.bf16.gmra.mxu0 %v379
      %v445 = vpop.f32.mrf.mxu0
      %v446 = vadd.f32 0.0, %v445
      %v447 = vpop.f32.mrf.mxu0
      %v448 = vpop.f32.mrf.mxu0
      %v449 = vadd.f32 0.0, %v448
      %v450 = vpop.f32.mrf.mxu0
      %451 = vmatprep.mubr.bf16.mxu0 0
      %452 = vmatmul.mubr.bf16.gmra.mxu0 %v382
      %v453 = vpop.f32.mrf.mxu0
      %v454 = vadd.f32 0.0, %v453
      %v455 = vpop.f32.mrf.mxu0
      %v456 = vpop.f32.mrf.mxu0
      %v457 = vadd.f32 0.0, %v456
      %v458 = vpop.f32.mrf.mxu0
      %459 = vmatprep.mubr.bf16.mxu0 0
      %460 = vmatmul.mubr.bf16.gmra.mxu0 %v385
      %v461 = vpop.f32.mrf.mxu0
      %v462 = vadd.f32 0.0, %v461
      %v463 = vpop.f32.mrf.mxu0
      %v464 = vpop.f32.mrf.mxu0
      %v465 = vadd.f32 0.0, %v464
      %v466 = vpop.f32.mrf.mxu0
      %467 = vmatprep.mubr.bf16.mxu0 0
      %468 = vmatmul.mubr.bf16.gmra.mxu0 %v388
      %v469 = vpop.f32.mrf.mxu0
      %v470 = vadd.f32 0.0, %v469
      %v471 = vpop.f32.mrf.mxu0
      %v472 = vpop.f32.mrf.mxu0
      %v473 = vadd.f32 0.0, %v472
      %v474 = vpop.f32.mrf.mxu0
      %475 = vmatprep.mubr.bf16.mxu0 0
      %476 = vmatmul.mubr.bf16.gmra.mxu0 %v391
      %v477 = vpop.f32.mrf.mxu0
      %v478 = vadd.f32 0.0, %v477
      %v479 = vpop.f32.mrf.mxu0
      %v480 = vpop.f32.mrf.mxu0
      %v481 = vadd.f32 0.0, %v480
      %v482 = vpop.f32.mrf.mxu0
      %483 = vmatprep.mubr.bf16.mxu0 0
      %484 = vmatmul.mubr.bf16.gmra.mxu0 %v394
      %v485 = vpop.f32.mrf.mxu0
      %v486 = vadd.f32 0.0, %v485
      %v487 = vpop.f32.mrf.mxu0
      %v488 = vpop.f32.mrf.mxu0
      %v489 = vadd.f32 0.0, %v488
      %v490 = vpop.f32.mrf.mxu0
      %491 = vmatprep.mubr.bf16.mxu0 0
      %492 = vmatmul.mubr.bf16.gmra.mxu0 %v397
      %v493 = vpop.f32.mrf.mxu0
      %v494 = vadd.f32 0.0, %v493
      %v495 = vpop.f32.mrf.mxu0
      %v496 = vpop.f32.mrf.mxu0
      %v497 = vadd.f32 0.0, %v496
      %v498 = vpop.f32.mrf.mxu0
      %499 = vdwg.mxu0
      %v500 = vsel %vm374, %v293, 0
      %v502 = vsel %vm374, %v294, 0
      %v504 = vsel %vm374, %v295, 0
      %v506 = vsel %vm374, %v296, 0
      %v508 = vsel %vm374, %v297, 0
      %v510 = vsel %vm374, %v298, 0
      %v512 = vsel %vm374, %v299, 0
      %v514 = vsel %vm374, %v300, 0
      %v517 = vsel %vm399, %v301, 0
      %519 = vmatprep.subr.bf16.mxu0 0
      %520 = vmatpush1.bf16.msra.mxu0 0
      %521 = vmatprep.subr.bf16.mxu0 0
      %522 = vmatpush1.bf16.msra.mxu0 0
      %523 = vmatprep.subr.bf16.mxu0 0
      %524 = vmatpush1.bf16.msra.mxu0 0
      %525 = vmatprep.subr.bf16.mxu0 0
      %526 = vmatpush1.bf16.msra.mxu0 0
      %527 = vmatprep.subr.bf16.mxu0 0
      %528 = vmatpush1.bf16.msra.mxu0 0
      %529 = vmatprep.subr.bf16.mxu0 0
      %530 = vmatpush1.bf16.msra.mxu0 0
      %531 = vmatprep.subr.bf16.mxu0 0
      %532 = vmatpush1.bf16.msra.mxu0 0
      %533 = vmatprep.subr.bf16.mxu0 0
      %534 = vmatpush1.bf16.msra.mxu0 %v517
      %535 = vmatprep.subr.bf16.mxu0 0
      %536 = vmatpush2.bf16.msra.mxu0 0
      %537 = vmatprep.subr.bf16.mxu0 0
      %538 = vmatpush2.bf16.msra.mxu0 0
      %539 = vmatprep.subr.bf16.mxu0 0
      %540 = vmatpush2.bf16.msra.mxu0 0
      %541 = vmatprep.subr.bf16.mxu0 0
      %542 = vmatpush2.bf16.msra.mxu0 0
      %543 = vmatprep.subr.bf16.mxu0 0
      %544 = vmatpush2.bf16.msra.mxu0 0
      %545 = vmatprep.subr.bf16.mxu0 0
      %546 = vmatpush2.bf16.msra.mxu0 0
      %547 = vmatprep.subr.bf16.mxu0 0
      %548 = vmatpush2.bf16.msra.mxu0 0
      %549 = vmatprep.subr.bf16.mxu0 0
      %550 = vmatpush2.bf16.msra.mxu0 0
      %551 = vmatprep.mubr.bf16.mxu0 0
      %552 = vmatmul.mubr.bf16.gmra.mxu0 %v500
      %v553 = vpop.f32.mrf.mxu0
      %v554 = vadd.f32 %v438, %v553
      %v555 = vpop.f32.mrf.mxu0
      %v556 = vpop.f32.mrf.mxu0
      %v557 = vadd.f32 %v441, %v556
      %v558 = vpop.f32.mrf.mxu0
      %559 = vmatprep.mubr.bf16.mxu0 0
      %560 = vmatmul.mubr.bf16.gmra.mxu0 %v502
      %v561 = vpop.f32.mrf.mxu0
      %v562 = vadd.f32 %v446, %v561
      %v563 = vpop.f32.mrf.mxu0
      %v564 = vpop.f32.mrf.mxu0
      %v565 = vadd.f32 %v449, %v564
      %v566 = vpop.f32.mrf.mxu0
      %567 = vmatprep.mubr.bf16.mxu0 0
      %568 = vmatmul.mubr.bf16.gmra.mxu0 %v504
      %v569 = vpop.f32.mrf.mxu0
      %v570 = vadd.f32 %v454, %v569
      %v571 = vpop.f32.mrf.mxu0
      %v572 = vpop.f32.mrf.mxu0
      %v573 = vadd.f32 %v457, %v572
      %v574 = vpop.f32.mrf.mxu0
      %575 = vmatprep.mubr.bf16.mxu0 0
      %576 = vmatmul.mubr.bf16.gmra.mxu0 %v506
      %v577 = vpop.f32.mrf.mxu0
      %v578 = vadd.f32 %v462, %v577
      %v579 = vpop.f32.mrf.mxu0
      %v580 = vpop.f32.mrf.mxu0
      %v581 = vadd.f32 %v465, %v580
      %v582 = vpop.f32.mrf.mxu0
      %583 = vmatprep.mubr.bf16.mxu0 0
      %584 = vmatmul.mubr.bf16.gmra.mxu0 %v508
      %v585 = vpop.f32.mrf.mxu0
      %v586 = vadd.f32 %v470, %v585
      %v587 = vpop.f32.mrf.mxu0
      %v588 = vpop.f32.mrf.mxu0
      %v589 = vadd.f32 %v473, %v588
      %v590 = vpop.f32.mrf.mxu0
      %591 = vmatprep.mubr.bf16.mxu0 0
      %592 = vmatmul.mubr.bf16.gmra.mxu0 %v510
      %v593 = vpop.f32.mrf.mxu0
      %v594 = vadd.f32 %v478, %v593
      %v595 = vpop.f32.mrf.mxu0
      %v596 = vpop.f32.mrf.mxu0
      %v597 = vadd.f32 %v481, %v596
      %v598 = vpop.f32.mrf.mxu0
      %599 = vmatprep.mubr.bf16.mxu0 0
      %600 = vmatmul.mubr.bf16.gmra.mxu0 %v512
      %v601 = vpop.f32.mrf.mxu0
      %v602 = vadd.f32 %v486, %v601
      %v603 = vpop.f32.mrf.mxu0
      %v604 = vpop.f32.mrf.mxu0
      %v605 = vadd.f32 %v489, %v604
      %v606 = vpop.f32.mrf.mxu0
      %607 = vmatprep.mubr.bf16.mxu0 0
      %608 = vmatmul.mubr.bf16.gmra.mxu0 %v514
      %v609 = vpop.f32.mrf.mxu0
      %v610 = vadd.f32 %v494, %v609
      %v611 = vpop.f32.mrf.mxu0
      %v612 = vpop.f32.mrf.mxu0
      %v613 = vadd.f32 %v497, %v612
      %v614 = vpop.f32.mrf.mxu0
      %615 = vdwg.mxu0
      %s616 = scalar_lea.vmem %s1, 4
      %v617 = vld [vmem:[%s616] sm:$0x3]
      %vm627 = vcmask 1046528
      %v628 = vrot.slane %v293, 1
      %v629 = vrot.slane %v294, 1
      %v630 = vsel %vm627, %v628, %v629
      %v631 = vrot.slane %v295, 1
      %v632 = vsel %vm627, %v629, %v631
      %v633 = vrot.slane %v296, 1
      %v634 = vsel %vm627, %v631, %v633
      %v635 = vrot.slane %v297, 1
      %v636 = vsel %vm627, %v633, %v635
      %v637 = vrot.slane %v298, 1
      %v638 = vsel %vm627, %v635, %v637
      %v639 = vrot.slane %v299, 1
      %v640 = vsel %vm627, %v637, %v639
      %v641 = vrot.slane %v300, 1
      %v642 = vsel %vm627, %v639, %v641
      %v643 = vrot.slane %v302, 1
      %v644 = vsel %vm627, %v641, %v643
      %v646 = vsel %vm374, %v630, 0
      %v649 = vsel %vm374, %v632, 0
      %v652 = vsel %vm374, %v634, 0
      %v655 = vsel %vm374, %v636, 0
      %v658 = vsel %vm374, %v638, 0
      %v661 = vsel %vm374, %v640, 0
      %v664 = vsel %vm374, %v642, 0
      %v667 = vsel %vm374, %v644, 0
      %v670 = vsel %vm399, %v617, 0
      %672 = vmatprep.subr.bf16.mxu0 0
      %673 = vmatpush1.bf16.msra.mxu0 0
      %674 = vmatprep.subr.bf16.mxu0 0
      %675 = vmatpush1.bf16.msra.mxu0 0
      %676 = vmatprep.subr.bf16.mxu0 0
      %677 = vmatpush1.bf16.msra.mxu0 0
      %678 = vmatprep.subr.bf16.mxu0 0
      %679 = vmatpush1.bf16.msra.mxu0 0
      %680 = vmatprep.subr.bf16.mxu0 0
      %681 = vmatpush1.bf16.msra.mxu0 0
      %682 = vmatprep.subr.bf16.mxu0 0
      %683 = vmatpush1.bf16.msra.mxu0 0
      %684 = vmatprep.subr.bf16.mxu0 0
      %685 = vmatpush1.bf16.msra.mxu0 0
      %686 = vmatprep.subr.bf16.mxu0 0
      %687 = vmatpush1.bf16.msra.mxu0 %v670
      %688 = vmatprep.subr.bf16.mxu0 0
      %689 = vmatpush2.bf16.msra.mxu0 0
      %690 = vmatprep.subr.bf16.mxu0 0
      %691 = vmatpush2.bf16.msra.mxu0 0
      %692 = vmatprep.subr.bf16.mxu0 0
      %693 = vmatpush2.bf16.msra.mxu0 0
      %694 = vmatprep.subr.bf16.mxu0 0
      %695 = vmatpush2.bf16.msra.mxu0 0
      %696 = vmatprep.subr.bf16.mxu0 0
      %697 = vmatpush2.bf16.msra.mxu0 0
      %698 = vmatprep.subr.bf16.mxu0 0
      %699 = vmatpush2.bf16.msra.mxu0 0
      %700 = vmatprep.subr.bf16.mxu0 0
      %701 = vmatpush2.bf16.msra.mxu0 0
      %702 = vmatprep.subr.bf16.mxu0 0
      %703 = vmatpush2.bf16.msra.mxu0 0
      %704 = vmatprep.mubr.bf16.mxu0 0
      %705 = vmatmul.mubr.bf16.gmra.mxu0 %v646
      %v706 = vpop.f32.mrf.mxu0
      %v707 = vadd.f32 0.0, %v706
      %v708 = vpop.f32.mrf.mxu0
      %v709 = vpop.f32.mrf.mxu0
      %v710 = vadd.f32 0.0, %v709
      %v711 = vpop.f32.mrf.mxu0
      %712 = vmatprep.mubr.bf16.mxu0 0
      %713 = vmatmul.mubr.bf16.gmra.mxu0 %v649
      %v714 = vpop.f32.mrf.mxu0
      %v715 = vadd.f32 0.0, %v714
      %v716 = vpop.f32.mrf.mxu0
      %v717 = vpop.f32.mrf.mxu0
      %v718 = vadd.f32 0.0, %v717
      %v719 = vpop.f32.mrf.mxu0
      %720 = vmatprep.mubr.bf16.mxu0 0
      %721 = vmatmul.mubr.bf16.gmra.mxu0 %v652
      %v722 = vpop.f32.mrf.mxu0
      %v723 = vadd.f32 0.0, %v722
      %v724 = vpop.f32.mrf.mxu0
      %v725 = vpop.f32.mrf.mxu0
      %v726 = vadd.f32 0.0, %v725
      %v727 = vpop.f32.mrf.mxu0
      %728 = vmatprep.mubr.bf16.mxu0 0
      %729 = vmatmul.mubr.bf16.gmra.mxu0 %v655
      %v730 = vpop.f32.mrf.mxu0
      %v731 = vadd.f32 0.0, %v730
      %v732 = vpop.f32.mrf.mxu0
      %v733 = vpop.f32.mrf.mxu0
      %v734 = vadd.f32 0.0, %v733
      %v735 = vpop.f32.mrf.mxu0
      %736 = vmatprep.mubr.bf16.mxu0 0
      %737 = vmatmul.mubr.bf16.gmra.mxu0 %v658
      %v738 = vpop.f32.mrf.mxu0
      %v739 = vadd.f32 0.0, %v738
      %v740 = vpop.f32.mrf.mxu0
      %v741 = vpop.f32.mrf.mxu0
      %v742 = vadd.f32 0.0, %v741
      %v743 = vpop.f32.mrf.mxu0
      %744 = vmatprep.mubr.bf16.mxu0 0
      %745 = vmatmul.mubr.bf16.gmra.mxu0 %v661
      %v746 = vpop.f32.mrf.mxu0
      %v747 = vadd.f32 0.0, %v746
      %v748 = vpop.f32.mrf.mxu0
      %v749 = vpop.f32.mrf.mxu0
      %v750 = vadd.f32 0.0, %v749
      %v751 = vpop.f32.mrf.mxu0
      %752 = vmatprep.mubr.bf16.mxu0 0
      %753 = vmatmul.mubr.bf16.gmra.mxu0 %v664
      %v754 = vpop.f32.mrf.mxu0
      %v755 = vadd.f32 0.0, %v754
      %v756 = vpop.f32.mrf.mxu0
      %v757 = vpop.f32.mrf.mxu0
      %v758 = vadd.f32 0.0, %v757
      %v759 = vpop.f32.mrf.mxu0
      %760 = vmatprep.mubr.bf16.mxu0 0
      %761 = vmatmul.mubr.bf16.gmra.mxu0 %v667
      %v762 = vpop.f32.mrf.mxu0
      %v763 = vadd.f32 0.0, %v762
      %v764 = vpop.f32.mrf.mxu0
      %v765 = vpop.f32.mrf.mxu0
      %v766 = vadd.f32 0.0, %v765
      %v767 = vpop.f32.mrf.mxu0
      %768 = vdwg.mxu0
      %v769 = vadd.f32 %v554, %v707
      %v770 = vadd.f32 %v557, %v710
      %v771 = vadd.f32 %v562, %v715
      %v772 = vadd.f32 %v565, %v718
      %v773 = vadd.f32 %v570, %v723
      %v774 = vadd.f32 %v573, %v726
      %v775 = vadd.f32 %v578, %v731
      %v776 = vadd.f32 %v581, %v734
      %v777 = vadd.f32 %v586, %v739
      %v778 = vadd.f32 %v589, %v742
      %v779 = vadd.f32 %v594, %v747
      %v780 = vadd.f32 %v597, %v750
      %v781 = vadd.f32 %v602, %v755
      %v782 = vadd.f32 %v605, %v758
      %v783 = vadd.f32 %v610, %v763
      %v784 = vadd.f32 %v613, %v766
      %v785 = vlaneseq
      %v786 = vshrl.u32 %v785, 7
      %v787 = vadd.s32 %v786, 8
      %v788 = vadd.s32 %v786, 16
      %v789 = vadd.s32 %v786, 24
      %v790 = vadd.s32 %v786, 32
      %v791 = vadd.s32 %v786, 40
      %v792 = vadd.s32 %v786, 48
      %v793 = vadd.s32 %v786, 56
      %v794 = vadd.s32 %v786, 64
      %v795 = vadd.s32 %v786, 72
      %v796 = vadd.s32 %v786, 80
      %v797 = vadd.s32 %v786, 88
      %v798 = vadd.s32 %v786, 96
      %v799 = vadd.s32 %v786, 104
      %v800 = vadd.s32 %v786, 112
      %v801 = vadd.s32 %v786, 120
      %v802 = vstv %s254
      %v803 = vadd.s32 %v786, %v802
      %v804 = vadd.s32 %v787, %v802
      %v805 = vadd.s32 %v788, %v802
      %v806 = vadd.s32 %v789, %v802
      %v807 = vadd.s32 %v790, %v802
      %v808 = vadd.s32 %v791, %v802
      %v809 = vadd.s32 %v792, %v802
      %v810 = vadd.s32 %v793, %v802
      %v811 = vadd.s32 %v794, %v802
      %v812 = vadd.s32 %v795, %v802
      %v813 = vadd.s32 %v796, %v802
      %v814 = vadd.s32 %v797, %v802
      %v815 = vadd.s32 %v798, %v802
      %v816 = vadd.s32 %v799, %v802
      %v817 = vadd.s32 %v800, %v802
      %v818 = vadd.s32 %v801, %v802
      %vm819 = vcmp.lt.s32.totalorder %v803, 16
      %vm820 = vcmp.lt.s32.totalorder %v804, 16
      %vm821 = vcmp.lt.s32.totalorder %v805, 16
      %vm822 = vcmp.lt.s32.totalorder %v806, 16
      %vm823 = vcmp.lt.s32.totalorder %v807, 16
      %vm824 = vcmp.lt.s32.totalorder %v808, 16
      %vm825 = vcmp.lt.s32.totalorder %v809, 16
      %vm826 = vcmp.lt.s32.totalorder %v810, 16
      %vm827 = vcmp.lt.s32.totalorder %v811, 16
      %vm828 = vcmp.lt.s32.totalorder %v812, 16
      %vm829 = vcmp.lt.s32.totalorder %v813, 16
      %vm830 = vcmp.lt.s32.totalorder %v814, 16
      %vm831 = vcmp.lt.s32.totalorder %v815, 16
      %vm832 = vcmp.lt.s32.totalorder %v816, 16
      %vm833 = vcmp.lt.s32.totalorder %v817, 16
      %vm834 = vcmp.lt.s32.totalorder %v818, 16
      %v835 = vsel %vm819, 1, 0
      %v836 = vsel %vm820, 1, 0
      %v837 = vsel %vm821, 1, 0
      %v838 = vsel %vm822, 1, 0
      %v839 = vsel %vm823, 1, 0
      %v840 = vsel %vm824, 1, 0
      %v841 = vsel %vm825, 1, 0
      %v842 = vsel %vm826, 1, 0
      %v843 = vsel %vm827, 1, 0
      %v844 = vsel %vm828, 1, 0
      %v845 = vsel %vm829, 1, 0
      %v846 = vsel %vm830, 1, 0
      %v847 = vsel %vm831, 1, 0
      %v848 = vsel %vm832, 1, 0
      %v849 = vsel %vm833, 1, 0
      %v850 = vsel %vm834, 1, 0
      %vm851 = vcmp.eq.s32.totalorder %v835, 1
      %vm852 = vcmp.eq.s32.totalorder %v836, 1
      %vm853 = vcmp.eq.s32.totalorder %v837, 1
      %vm854 = vcmp.eq.s32.totalorder %v838, 1
      %vm855 = vcmp.eq.s32.totalorder %v839, 1
      %vm856 = vcmp.eq.s32.totalorder %v840, 1
      %vm857 = vcmp.eq.s32.totalorder %v841, 1
      %vm858 = vcmp.eq.s32.totalorder %v842, 1
      %vm859 = vcmp.eq.s32.totalorder %v843, 1
      %vm860 = vcmp.eq.s32.totalorder %v844, 1
      %vm861 = vcmp.eq.s32.totalorder %v845, 1
      %vm862 = vcmp.eq.s32.totalorder %v846, 1
      %vm863 = vcmp.eq.s32.totalorder %v847, 1
      %vm864 = vcmp.eq.s32.totalorder %v848, 1
      %vm865 = vcmp.eq.s32.totalorder %v849, 1
      %vm866 = vcmp.eq.s32.totalorder %v850, 1
      %v867 = vsel %vm851, %v769, 0.0
      %v868 = vsel %vm852, %v770, 0.0
      %v869 = vsel %vm853, %v771, 0.0
      %v870 = vsel %vm854, %v772, 0.0
      %v871 = vsel %vm855, %v773, 0.0
      %v872 = vsel %vm856, %v774, 0.0
      %v873 = vsel %vm857, %v775, 0.0
      %v874 = vsel %vm858, %v776, 0.0
      %v875 = vsel %vm859, %v777, 0.0
      %v876 = vsel %vm860, %v778, 0.0
      %v877 = vsel %vm861, %v779, 0.0
      %v878 = vsel %vm862, %v780, 0.0
      %v879 = vsel %vm863, %v781, 0.0
      %v880 = vsel %vm864, %v782, 0.0
      %v881 = vsel %vm865, %v783, 0.0
      %v882 = vsel %vm866, %v784, 0.0
      %883 = vst [vmem:[%s240] sm:$0xff] %v867
      %884 = vst [vmem:[%s240 + $0x8] sm:$0xff] %v868
      %885 = vst [vmem:[%s240 + $0x10] sm:$0xff] %v869
      %886 = vst [vmem:[%s240 + $0x18] sm:$0xff] %v870
      %887 = vst [vmem:[%s240 + $0x20] sm:$0xff] %v871
      %888 = vst [vmem:[%s240 + $0x28] sm:$0xff] %v872
      %889 = vst [vmem:[%s240 + $0x30] sm:$0xff] %v873
      %890 = vst [vmem:[%s240 + $0x38] sm:$0xff] %v874
      %891 = vst [vmem:[%s240 + $0x40] sm:$0xff] %v875
      %892 = vst [vmem:[%s240 + $0x48] sm:$0xff] %v876
      %893 = vst [vmem:[%s240 + $0x50] sm:$0xff] %v877
      %894 = vst [vmem:[%s240 + $0x58] sm:$0xff] %v878
      %895 = vst [vmem:[%s240 + $0x60] sm:$0xff] %v879
      %896 = vst [vmem:[%s240 + $0x68] sm:$0xff] %v880
      %897 = vst [vmem:[%s240 + $0x70] sm:$0xff] %v881
      %898 = vst [vmem:[%s240 + $0x78] sm:$0xff] %v882
      %v899 = vadd.f32 %v867, %v868
      %v900 = vadd.f32 %v899, %v869
      %v901 = vadd.f32 %v900, %v870
      %v902 = vadd.f32 %v901, %v871
      %v903 = vadd.f32 %v902, %v872
      %v904 = vadd.f32 %v903, %v873
      %v905 = vadd.f32 %v904, %v874
      %v906 = vadd.f32 %v905, %v875
      %v907 = vadd.f32 %v906, %v876
      %v908 = vadd.f32 %v907, %v877
      %v909 = vadd.f32 %v908, %v878
      %v910 = vadd.f32 %v909, %v879
      %v911 = vadd.f32 %v910, %v880
      %v912 = vadd.f32 %v911, %v881
      %v913 = vadd.f32 %v912, %v882
      %v914 = vrot.slane %v913, 4
      %v915 = vadd.f32 %v913, %v914
      %v916 = vrot.slane %v915, 2
      %v917 = vadd.f32 %v915, %v916
      %v918 = vrot.slane %v917, 1
      %v919 = vadd.f32 %v917, %v918
      %920 = vst [vmem:[%s246] sm:$0x1] %v919
      %v921 = vmul.f32 %v867, %v867
      %v922 = vmul.f32 %v868, %v868
      %v923 = vmul.f32 %v869, %v869
      %v924 = vmul.f32 %v870, %v870
      %v925 = vmul.f32 %v871, %v871
      %v926 = vmul.f32 %v872, %v872
      %v927 = vmul.f32 %v873, %v873
      %v928 = vmul.f32 %v874, %v874
      %v929 = vmul.f32 %v875, %v875
      %v930 = vmul.f32 %v876, %v876
      %v931 = vmul.f32 %v877, %v877
      %v932 = vmul.f32 %v878, %v878
      %v933 = vmul.f32 %v879, %v879
      %v934 = vmul.f32 %v880, %v880
      %v935 = vmul.f32 %v881, %v881
      %v936 = vmul.f32 %v882, %v882
      %v937 = vadd.f32 %v921, %v922
      %v938 = vadd.f32 %v937, %v923
      %v939 = vadd.f32 %v938, %v924
      %v940 = vadd.f32 %v939, %v925
      %v941 = vadd.f32 %v940, %v926
      %v942 = vadd.f32 %v941, %v927
      %v943 = vadd.f32 %v942, %v928
      %v944 = vadd.f32 %v943, %v929
      %v945 = vadd.f32 %v944, %v930
      %v946 = vadd.f32 %v945, %v931
      %v947 = vadd.f32 %v946, %v932
      %v948 = vadd.f32 %v947, %v933
      %v949 = vadd.f32 %v948, %v934
      %v950 = vadd.f32 %v949, %v935
      %v951 = vadd.f32 %v950, %v936
      %v952 = vrot.slane %v951, 4
      %v953 = vadd.f32 %v951, %v952
      %v954 = vrot.slane %v953, 2
      %v955 = vadd.f32 %v953, %v954
      %v956 = vrot.slane %v955, 1
      %v957 = vadd.f32 %v955, %v956
      %958 = vst [vmem:[%s252] sm:$0x1] %v957
      %p959 = scmp.lt.s32.totalorder %s20, 1
      %s960 = scalar_select %p959, %s20, 1
      %p961 = scmp.lt.s32.totalorder %s21, 0
      %s962 = scalar_select %p961, %s21, 0
      %s963 = smul.addr %s962, 16
      %s964 = smul.addr %s960, 16
      %s965 = sadd.s32 %s963, %s964
      %s966 = smul.addr %s965, 8
      %s967 = scalar_lea.vmem %s2, %s966
      %p968 = scmp.lt.s32.totalorder %s20, 1
      %s969 = scalar_select %p968, %s20, 1
      %p970 = scmp.lt.s32.totalorder %s21, 0
      %s971 = scalar_select %p970, %s21, 0
      %s972 = sadd.s32 %s971, %s969
      %s973 = scalar_lea.vmem %s3, %s972
      %p974 = scmp.lt.s32.totalorder %s20, 1
      %s975 = scalar_select %p974, %s20, 1
      %p976 = scmp.lt.s32.totalorder %s21, 0
      %s977 = scalar_select %p976, %s21, 0
      %s978 = sadd.s32 %s977, %s975
      %s979 = scalar_lea.vmem %s4, %s978
      // Predicated region
      $region29: #{conv_block_forward.2} parent=27 // pred_check
        %p980 = pneg %p95
      $region30: #{conv_block_forward.2} parent=27 // pred_check_branch
        %982 = sbr.rel (%p980) target = $region32
      $region31: #{conv_block_forward.2} parent=27 // pred_region
        _
      $region32: #{conv_block_forward.2} parent=27 // pred_fallthru
        _
      // Predicated region
      $region33: #{conv_block_forward.2} parent=27 // pred_check
        %p983 = pneg %p123
      $region34: #{conv_block_forward.2} parent=27 // pred_check_branch
        %985 = sbr.rel (%p983) target = $region36
      $region35: #{conv_block_forward.2} parent=27 // pred_region
        _
      $region36: #{conv_block_forward.2} parent=27 // pred_fallthru
        _
      // Predicated region
      $region37: #{conv_block_forward.2} parent=27 // pred_check
        %p986 = pneg %p151
      $region38: #{conv_block_forward.2} parent=27 // pred_check_branch
        %988 = sbr.rel (%p986) target = $region40
      $region39: #{conv_block_forward.2} parent=27 // pred_region
        _
      $region40: #{conv_block_forward.2} parent=27 // pred_fallthru
        _
    $region28: #{conv_block_forward.2} parent=5 // pred_fallthru
      _
    %p989 = scmp.le.s32.totalorder 2, %s11
    // Predicated region
    $region41: #{conv_block_forward.2} parent=5 // pred_check
      %p990 = pneg %p989
    $region42: #{conv_block_forward.2} parent=5 // pred_check_branch
      %992 = sbr.rel (%p990) target = $region44
    $region43: #{conv_block_forward.2} parent=5 // pred_region
      %s993 = ssub.s32 %s11, 2
      // Predicated region
      $region45: #{conv_block_forward.2} parent=43 // pred_check
        %p994 = pneg %p101
      $region46: #{conv_block_forward.2} parent=43 // pred_check_branch
        %996 = sbr.rel (%p994) target = $region48
      $region47: #{conv_block_forward.2} parent=43 // pred_region
        %p997 = scmp.lt.s32.totalorder %s22, 1
        %s998 = scalar_select %p997, %s22, 1
        %p999 = scmp.lt.s32.totalorder %s23, 0
        %s1000 = scalar_select %p999, %s23, 0
        %s1001 = smul.addr %s1000, 16
        %s1002 = smul.addr %s998, 16
        %s1003 = sadd.s32 %s1001, %s1002
        %s1004 = smul.addr %s1003, 8
        %s1005 = scalar_lea.vmem %s2, %s1004
      $region48: #{conv_block_forward.2} parent=43 // pred_fallthru
        _
      // Predicated region
      $region49: #{conv_block_forward.2} parent=43 // pred_check
        %p1006 = pneg %p129
      $region50: #{conv_block_forward.2} parent=43 // pred_check_branch
        %1008 = sbr.rel (%p1006) target = $region52
      $region51: #{conv_block_forward.2} parent=43 // pred_region
        %p1009 = scmp.lt.s32.totalorder %s22, 1
        %s1010 = scalar_select %p1009, %s22, 1
        %p1011 = scmp.lt.s32.totalorder %s23, 0
        %s1012 = scalar_select %p1011, %s23, 0
        %s1013 = sadd.s32 %s1012, %s1010
        %s1014 = scalar_lea.vmem %s3, %s1013
      $region52: #{conv_block_forward.2} parent=43 // pred_fallthru
        _
      // Predicated region
      $region53: #{conv_block_forward.2} parent=43 // pred_check
        %p1015 = pneg %p157
      $region54: #{conv_block_forward.2} parent=43 // pred_check_branch
        %1017 = sbr.rel (%p1015) target = $region56
      $region55: #{conv_block_forward.2} parent=43 // pred_region
        %p1018 = scmp.lt.s32.totalorder %s22, 1
        %s1019 = scalar_select %p1018, %s22, 1
        %p1020 = scmp.lt.s32.totalorder %s23, 0
        %s1021 = scalar_select %p1020, %s23, 0
        %s1022 = sadd.s32 %s1021, %s1019
        %s1023 = scalar_lea.vmem %s4, %s1022
      $region56: #{conv_block_forward.2} parent=43 // pred_fallthru
        _
    $region44: #{conv_block_forward.2} parent=5 // pred_fallthru
      _
  $region6: #{conv_block_forward.2} parent=0 // loop_footer
    %s15 = sadd.s32 1, %s11
  $region7: #{conv_block_forward.2} parent=0 // loop_footer_branch
    %10 = sbr.rel target = $region3
  $region8: #{conv_block_forward.2} parent=0 // loop_exit
    _

</llo_original>
